<compile_context>
chip_gen: v5e
topology: v5e:2x2
jax: 0.10.0
libtpu: 0.0.40
codegen_flags: <defaults>
</compile_context>

<pallas_src>
import jax
import jax.numpy as jnp
from jax import lax
from jax.experimental import pallas as pl
from jax.experimental.pallas import tpu as pltpu


# ---------------------------------------------------------------------------
# Pallas kernel: fused imnet MLP 640 -> 256 -> 256 -> 128 (3-wide head zero-
# padded to 128 lanes) + in-kernel local-ensemble weighted accumulation over
# the branch grid axis.
# ---------------------------------------------------------------------------
def _imnet_kernel(x_ref, wgt_ref, w1_ref, b1_ref, w2_ref, b2_ref,
                  w3_ref, b3_ref, o_ref):
    # layer 1: single bf16 x bf16 MXU contraction over K = 640 (features + rel + pad)
    h = jnp.dot(x_ref[...], w1_ref[...], preferred_element_type=jnp.float32)
    h = jnp.maximum(h + b1_ref[...], 0.0).astype(jnp.bfloat16)
    # layer 2
    h = jnp.dot(h, w2_ref[...], preferred_element_type=jnp.float32)
    h = jnp.maximum(h + b2_ref[...], 0.0).astype(jnp.bfloat16)
    # layer 3 (head padded to 128 lanes -> unmasked, lane-dense stores)
    y = jnp.dot(h, w3_ref[...], preferred_element_type=jnp.float32) + b3_ref[...]
    # local-ensemble: weight this branch and accumulate into the resident output block
    y = y * wgt_ref[...]                       # (tile_m, 128) * (tile_m, 1)
    k = pl.program_id(1)

    @pl.when(k == 0)
    def _():
        o_ref[...] = y

    @pl.when(k > 0)
    def _():
        o_ref[...] += y


def pallas_imnet(x, wgt, params, *, tile_m=None):
    """x: (4, N, 640) bf16, wgt: (4, N) f32 area weights -> (N, 128) f32 (cols [:3] valid)."""
    n_branch, N, Din = x.shape
    w1, b1, w2, b2, w3p, b3p = params
    Hd = w1.shape[1]
    Dpad = w3p.shape[1]                        # 128 (zero-padded head)

    if tile_m is None:
        # Real LIIF workloads have N = B*Q in the 1e5-1e6 range: big tiles amortize the
        # ~0.35 us per-grid-step overhead and keep the resident weights busy longer.
        # Footprint at tile_m=1024 is ~6 MiB (double-buffered) -> fine on every gen.
        tile_m = 1024
        while tile_m > 128 and N < 2 * tile_m:
            tile_m //= 2

    n_blocks = pl.cdiv(N, tile_m)
    if n_blocks > 1 and n_blocks % 2:
        n_blocks += 1                          # even row-block count -> both v7x TCs busy
    Np = n_blocks * tile_m
    if Np != N:                                # pad rows instead of asserting divisibility
        x = jnp.pad(x, ((0, 0), (0, Np - N), (0, 0)))
        wgt = jnp.pad(wgt, ((0, 0), (0, Np - N)))   # zero weights kill padded-row garbage
    wgt = wgt.reshape(n_branch, Np, 1)

    out = pl.pallas_call(
        _imnet_kernel,
        out_shape=jax.ShapeDtypeStruct((Np, Dpad), jnp.float32),
        grid_spec=pltpu.PrefetchScalarGridSpec(
            num_scalar_prefetch=0,
            grid=(n_blocks, n_branch),                         # branch = reduction, last
            in_specs=[
                pl.BlockSpec((None, tile_m, Din), lambda i, k: (k, i, 0)),  # bf16 acts
                pl.BlockSpec((None, tile_m, 1), lambda i, k: (k, i, 0)),    # f32 weights
                pl.BlockSpec((Din, Hd), lambda i, k: (0, 0)),               # w1 (bf16)
                pl.BlockSpec((1, Hd), lambda i, k: (0, 0)),                 # b1
                pl.BlockSpec((Hd, Hd), lambda i, k: (0, 0)),                # w2 (bf16)
                pl.BlockSpec((1, Hd), lambda i, k: (0, 0)),                 # b2
                pl.BlockSpec((Hd, Dpad), lambda i, k: (0, 0)),              # w3 padded
                pl.BlockSpec((1, Dpad), lambda i, k: (0, 0)),               # b3 padded
            ],
            out_specs=pl.BlockSpec((tile_m, Dpad), lambda i, k: (i, 0)),    # resident acc
        ),
        compiler_params=pltpu.CompilerParams(
            dimension_semantics=("parallel", "arbitrary"),
            vmem_limit_bytes=32 * 1024 * 1024,
        ),
    )(x, wgt, w1, b1, w2, b2, w3p, b3p)
    return out[:N]


# ---------------------------------------------------------------------------
# Encoder (synthetic 3x3 conv 3 -> 64, pad 1) — XLA conv per perf review
# ---------------------------------------------------------------------------
def gen_feat(inp, enc_params):
    w, b = enc_params                          # w: (64, 3, 3, 3) OIHW, b: (64,)
    out = lax.conv_general_dilated(
        inp, w, window_strides=(1, 1), padding=((1, 1), (1, 1)),
        dimension_numbers=("NCHW", "OIHW", "NCHW"))
    return out + b[None, :, None, None]        # (B, 64, H, W)


# ---------------------------------------------------------------------------
# query_rgb: local_ensemble + feat_unfold + cell_decode.  The 3x3 taps are
# gathered tap-major straight from the compact feature map (no unfold blow-up,
# no runtime channel relayout); the ensemble weighting happens in the kernel.
# ---------------------------------------------------------------------------
def query_rgb(feat, coord, cell, imnet_params):
    B, C, H, W = feat.shape
    Q = coord.shape[1]

    rx = 2.0 / H / 2.0                         # == 1/H
    ry = 2.0 / W / 2.0                         # == 1/W
    eps = 1e-6

    # 4 local-ensemble shifts, same order as the reference double loop.
    shifts = jnp.array(
        [[vx * rx + eps, vy * ry + eps] for vx in (-1, 1) for vy in (-1, 1)],
        dtype=jnp.float32)                                   # (4, 2)
    c_ = coord[None, :, :, :] + shifts[:, None, None, :]     # (4, B, Q, 2)
    c_ = jnp.clip(c_, -1.0 + 1e-6, 1.0 - 1e-6)

    # nearest-neighbour indices (F.grid_sample, mode='nearest', align_corners=False)
    iy = jnp.clip(jnp.round(((c_[..., 0] + 1.0) * H - 1.0) * 0.5).astype(jnp.int32), 0, H - 1)
    ix = jnp.clip(jnp.round(((c_[..., 1] + 1.0) * W - 1.0) * 0.5).astype(jnp.int32), 0, W - 1)

    # q_coord of the nearest pixel centre (== grid_sample over make_coord), analytic.
    qy = -1.0 + rx + 2.0 * rx * iy.astype(jnp.float32)
    qx = -1.0 + ry + 2.0 * ry * ix.astype(jnp.float32)
    rel = jnp.stack([(coord[None, ..., 0] - qy) * H,
                     (coord[None, ..., 1] - qx) * W], axis=-1)        # (4, B, Q, 2)
    rel_cell = jnp.broadcast_to((cell * jnp.array([H, W], jnp.float32))[None],
                                (4, B, Q, 2))
    areas = jnp.abs(rel[..., 0] * rel[..., 1]) + 1e-9                 # (4, B, Q)

    # 3x3 taps gathered straight from feat (zero outside, matching F.unfold pad=1).
    dks = jnp.arange(3, dtype=jnp.int32) - 1
    dy = jnp.repeat(dks, 3)                                           # ki order
    dx = jnp.tile(dks, 3)                                             # kj order
    ty = iy[..., None] + dy                                           # (4, B, Q, 9)
    tx = ix[..., None] + dx
    valid = (ty >= 0) & (ty < H) & (tx >= 0) & (tx < W)
    gidx = (jnp.arange(B, dtype=jnp.int32)[None, :, None, None] * (H * W)
            + jnp.clip(ty, 0, H - 1) * W + jnp.clip(tx, 0, W - 1))    # (4, B, Q, 9)

    feat_rows = feat.transpose(0, 2, 3, 1).reshape(B * H * W, C).astype(jnp.bfloat16)
    taps = jnp.take(feat_rows, gidx.reshape(-1), axis=0).reshape(4, B, Q, 9, C)
    taps = jnp.where(valid[..., None], taps, jnp.zeros((), taps.dtype))
    # tap-major order (k*C + c): W1's feature rows were permuted to match at init,
    # so no runtime relayout of the big activation tensor is needed.
    q_feat = taps.reshape(4, B * Q, 9 * C)                            # (4, BQ, 576) bf16

    # Single 640-wide bf16 stream: 576 features + 2 rel_coord + 2 rel_cell + 60 zero
    # lanes (free MXU granules: ceil(640/128) == ceil(576/128)).
    din_pad = 640
    x = jnp.concatenate(
        [q_feat,
         rel.reshape(4, B * Q, 2).astype(jnp.bfloat16),
         rel_cell.reshape(4, B * Q, 2).astype(jnp.bfloat16),
         jnp.zeros((4, B * Q, din_pad - 9 * C - 4), jnp.bfloat16)], axis=-1)

    # local-ensemble weighting: the reference swaps areas 0<->3 and 1<->2.
    tot = jnp.sum(areas, axis=0)                                      # (B, Q)
    wgt = (areas[::-1] / tot[None]).reshape(4, B * Q)                 # (4, BQ) f32

    out = pallas_imnet(x, wgt, imnet_params)                          # (BQ, 128) f32
    return out[:, :3].reshape(B, Q, 3)


def liif_forward(inp, coord, cell, enc_params, imnet_params):
    feat = gen_feat(inp, enc_params)
    return query_rgb(feat, coord, cell, imnet_params)


# ---------------------------------------------------------------------------
# Deterministic synthetic parameters (encoder/imnet are opaque ONNX sessions
# in the original module; no checkpoint loading here).
# ---------------------------------------------------------------------------
def init_params(key):
    k = jax.random.split(key, 8)
    # encoder: 3x3 conv, 3 -> 64 (output channel count fixed by gen_feat's binding)
    w_enc = jax.random.normal(k[0], (64, 3, 3, 3), jnp.float32) * (1.0 / 27.0) ** 0.5
    b_enc = jax.random.normal(k[1], (64,), jnp.float32) * 0.01
    # imnet: MLP 580 -> 256 -> 256 -> 3 (feat_unfold + cell_decode input width)
    C, hd, dout = 64, 256, 3
    din = C * 9 + 4
    din_pad, dout_pad = 640, 128
    w1 = jax.random.normal(k[2], (din, hd), jnp.float32) * (1.0 / din) ** 0.5
    b1 = jax.random.normal(k[3], (1, hd), jnp.float32) * 0.01
    w2 = jax.random.normal(k[4], (hd, hd), jnp.float32) * (1.0 / hd) ** 0.5
    b2 = jax.random.normal(k[5], (1, hd), jnp.float32) * 0.01
    w3 = jax.random.normal(k[6], (hd, dout), jnp.float32) * (1.0 / hd) ** 0.5
    b3 = jax.random.normal(k[7], (1, dout), jnp.float32) * 0.01

    # Permute W1's 576 feature rows from the reference unfold order (c*9 + k) to
    # tap-major order (k*C + c), append the 4 rel/cell rows, zero-pad K to 640, and
    # zero-pad the 3-wide head to 128 lanes.  All one-time host-side work.
    w1_feat = w1[: C * 9].reshape(C, 9, hd).transpose(1, 0, 2).reshape(C * 9, hd)
    w1_full = (jnp.zeros((din_pad, hd), jnp.float32)
               .at[: C * 9].set(w1_feat)
               .at[C * 9: C * 9 + 4].set(w1[C * 9:])
               .astype(jnp.bfloat16))
    w3_pad = jnp.zeros((hd, dout_pad), jnp.float32).at[:, :dout].set(w3).astype(jnp.bfloat16)
    b3_pad = jnp.zeros((1, dout_pad), jnp.float32).at[:, :dout].set(b3)
    imnet_params = (w1_full, b1, w2.astype(jnp.bfloat16), b2, w3_pad, b3_pad)
    return (w_enc, b_enc), imnet_params


if __name__ == "__main__":
    key = jax.random.PRNGKey(0)
    kp, ki, kc, kl = jax.random.split(key, 4)

    # B*Q = 300 rows -> exercises row padding and the even-block bump (3 -> 4 blocks).
    B, C, H, W, Q = 2, 3, 8, 8, 150
    enc_params, imnet_params = init_params(kp)

    inp = jax.random.normal(ki, (B, C, H, W), jnp.float32)
    coord = jax.random.uniform(kc, (B, Q, 2), jnp.float32, minval=-1.0, maxval=1.0)
    # typical LIIF cell: 2/out_h, 2/out_w (2x upsampling of the 8x8 feature map)
    cell = jnp.broadcast_to(
        jnp.array([2.0 / (2 * H), 2.0 / (2 * W)], jnp.float32), (B, Q, 2))

    out = jax.jit(liif_forward)(inp, coord, cell, enc_params, imnet_params)
    out = jax.block_until_ready(out)
    assert out.shape == (B, Q, 3) and out.dtype == jnp.float32
    print("KERNEL_OK")
</pallas_src>

<mosaic_0001>
module attributes {stable_mosaic.version = 11 : i64} {
  func.func @_imnet_kernel(%arg0: i32, %arg1: i32, %arg2: memref<1x128x640xbf16, #tpu.memory_space<vmem>>, %arg3: memref<1x128x1xf32, #tpu.memory_space<vmem>>, %arg4: memref<640x256xbf16, #tpu.memory_space<vmem>>, %arg5: memref<1x256xf32, #tpu.memory_space<vmem>>, %arg6: memref<256x256xbf16, #tpu.memory_space<vmem>>, %arg7: memref<1x256xf32, #tpu.memory_space<vmem>>, %arg8: memref<256x128xbf16, #tpu.memory_space<vmem>>, %arg9: memref<1x128xf32, #tpu.memory_space<vmem>>, %arg10: memref<128x128xf32, #tpu.memory_space<vmem>>) attributes {dimension_semantics = [#tpu.dimension_semantics<parallel>, #tpu.dimension_semantics<arbitrary>], iteration_bounds = array<i64: 4, 4>, scalar_prefetch = 0 : i64, scratch_operands = 0 : i64, tpu.core_type = #tpu.core_type<tc>, window_params = [{transform_indices = @transform_0, window_bounds = array<i64: 1, 128, 640>}, {transform_indices = @transform_1, window_bounds = array<i64: 1, 128, 1>}, {pipeline_mode = #tpu.pipeline_mode<synchronous>, transform_indices = @transform_2, window_bounds = array<i64: 640, 256>}, {pipeline_mode = #tpu.pipeline_mode<synchronous>, transform_indices = @transform_3, window_bounds = array<i64: 1, 256>}, {pipeline_mode = #tpu.pipeline_mode<synchronous>, transform_indices = @transform_4, window_bounds = array<i64: 256, 256>}, {pipeline_mode = #tpu.pipeline_mode<synchronous>, transform_indices = @transform_5, window_bounds = array<i64: 1, 256>}, {pipeline_mode = #tpu.pipeline_mode<synchronous>, transform_indices = @transform_6, window_bounds = array<i64: 256, 128>}, {pipeline_mode = #tpu.pipeline_mode<synchronous>, transform_indices = @transform_7, window_bounds = array<i64: 1, 128>}, {transform_indices = @transform_8, window_bounds = array<i64: 128, 128>}]} {
    %c0 = arith.constant 0 : index
    %c0_0 = arith.constant 0 : index
    %c0_1 = arith.constant 0 : index
    %0 = vector.load %arg2[%c0, %c0_0, %c0_1] : memref<1x128x640xbf16, #tpu.memory_space<vmem>>, vector<1x128x640xbf16>
    %1 = vector.shape_cast %0 : vector<1x128x640xbf16> to vector<128x640xbf16>
    %c0_2 = arith.constant 0 : index
    %c0_3 = arith.constant 0 : index
    %2 = vector.load %arg4[%c0_2, %c0_3] : memref<640x256xbf16, #tpu.memory_space<vmem>>, vector<640x256xbf16>
    %cst = arith.constant dense<0.000000e+00> : vector<128x256xf32>
    %3 = tpu.matmul %1, %2, %cst {dimension_numbers = #tpu.dot_dimension_numbers<[1], [0], [0], [1], [0, 0, 1, 1], [], []>} : vector<128x640xbf16>, vector<640x256xbf16>, vector<128x256xf32> -> vector<128x256xf32>
    %c0_4 = arith.constant 0 : index
    %c0_5 = arith.constant 0 : index
    %4 = vector.load %arg5[%c0_4, %c0_5] : memref<1x256xf32, #tpu.memory_space<vmem>>, vector<1x256xf32>
    %5 = vector.broadcast %4 : vector<1x256xf32> to vector<128x256xf32>
    %6 = arith.addf %3, %5 : vector<128x256xf32>
    %cst_6 = arith.constant 0.000000e+00 : f32
    %7 = vector.broadcast %cst_6 : f32 to vector<128x256xf32>
    %8 = arith.maximumf %6, %7 : vector<128x256xf32>
    %9 = arith.truncf %8 : vector<128x256xf32> to vector<128x256xbf16>
    %c0_7 = arith.constant 0 : index
    %c0_8 = arith.constant 0 : index
    %10 = vector.load %arg6[%c0_7, %c0_8] : memref<256x256xbf16, #tpu.memory_space<vmem>>, vector<256x256xbf16>
    %cst_9 = arith.constant dense<0.000000e+00> : vector<128x256xf32>
    %11 = tpu.matmul %9, %10, %cst_9 {dimension_numbers = #tpu.dot_dimension_numbers<[1], [0], [0], [1], [0, 0, 1, 1], [], []>} : vector<128x256xbf16>, vector<256x256xbf16>, vector<128x256xf32> -> vector<128x256xf32>
    %c0_10 = arith.constant 0 : index
    %c0_11 = arith.constant 0 : index
    %12 = vector.load %arg7[%c0_10, %c0_11] : memref<1x256xf32, #tpu.memory_space<vmem>>, vector<1x256xf32>
    %13 = vector.broadcast %12 : vector<1x256xf32> to vector<128x256xf32>
    %14 = arith.addf %11, %13 : vector<128x256xf32>
    %cst_12 = arith.constant 0.000000e+00 : f32
    %15 = vector.broadcast %cst_12 : f32 to vector<128x256xf32>
    %16 = arith.maximumf %14, %15 : vector<128x256xf32>
    %17 = arith.truncf %16 : vector<128x256xf32> to vector<128x256xbf16>
    %c0_13 = arith.constant 0 : index
    %c0_14 = arith.constant 0 : index
    %18 = vector.load %arg8[%c0_13, %c0_14] : memref<256x128xbf16, #tpu.memory_space<vmem>>, vector<256x128xbf16>
    %cst_15 = arith.constant dense<0.000000e+00> : vector<128x128xf32>
    %19 = tpu.matmul %17, %18, %cst_15 {dimension_numbers = #tpu.dot_dimension_numbers<[1], [0], [0], [1], [0, 0, 1, 1], [], []>} : vector<128x256xbf16>, vector<256x128xbf16>, vector<128x128xf32> -> vector<128x128xf32>
    %c0_16 = arith.constant 0 : index
    %c0_17 = arith.constant 0 : index
    %20 = vector.load %arg9[%c0_16, %c0_17] : memref<1x128xf32, #tpu.memory_space<vmem>>, vector<1x128xf32>
    %21 = vector.broadcast %20 : vector<1x128xf32> to vector<128x128xf32>
    %22 = arith.addf %19, %21 : vector<128x128xf32>
    %c0_18 = arith.constant 0 : index
    %c0_19 = arith.constant 0 : index
    %c0_20 = arith.constant 0 : index
    %23 = vector.load %arg3[%c0_18, %c0_19, %c0_20] : memref<1x128x1xf32, #tpu.memory_space<vmem>>, vector<1x128x1xf32>
    %24 = vector.shape_cast %23 : vector<1x128x1xf32> to vector<128x1xf32>
    %25 = vector.broadcast %24 : vector<128x1xf32> to vector<128x128xf32>
    %26 = arith.mulf %22, %25 : vector<128x128xf32>
    %c0_i32 = arith.constant 0 : i32
    %27 = arith.cmpi eq, %arg1, %c0_i32 : i32
    %28 = arith.extui %27 : i1 to i32
    %c0_i32_21 = arith.constant 0 : i32
    %29 = arith.cmpi ne, %28, %c0_i32_21 : i32
    scf.if %29 {
      %c0_24 = arith.constant 0 : index
      %c0_25 = arith.constant 0 : index
      %33 = vector.load %arg10[%c0_24, %c0_25] : memref<128x128xf32, #tpu.memory_space<vmem>>, vector<128x128xf32>
      tpu.vector_store %arg10[%c0_24, %c0_25], %26 {strides = array<i32>} : memref<128x128xf32, #tpu.memory_space<vmem>>, vector<128x128xf32>,
    } else {
    }
    %c0_i32_22 = arith.constant 0 : i32
    %30 = arith.cmpi sgt, %arg1, %c0_i32_22 : i32
    %31 = arith.extui %30 : i1 to i32
    %c0_i32_23 = arith.constant 0 : i32
    %32 = arith.cmpi ne, %31, %c0_i32_23 : i32
    scf.if %32 {
      %c0_24 = arith.constant 0 : index
      %c0_25 = arith.constant 0 : index
      %33 = vector.load %arg10[%c0_24, %c0_25] : memref<128x128xf32, #tpu.memory_space<vmem>>, vector<128x128xf32>
      %34 = arith.addf %33, %26 : vector<128x128xf32>
      %c0_26 = arith.constant 0 : index
      %c0_27 = arith.constant 0 : index
      %35 = vector.load %arg10[%c0_26, %c0_27] : memref<128x128xf32, #tpu.memory_space<vmem>>, vector<128x128xf32>
      tpu.vector_store %arg10[%c0_26, %c0_27], %34 {strides = array<i32>} : memref<128x128xf32, #tpu.memory_space<vmem>>, vector<128x128xf32>,
    } else {
    }
    return
  }
  func.func @transform_0(%arg0: i32, %arg1: i32) -> (i32, i32, i32) {
    %c0_i32 = arith.constant 0 : i32
    %c0_i32_0 = arith.constant 0 : i32
    return %arg1, %arg0, %c0_i32 : i32, i32, i32
  }
  func.func @transform_1(%arg0: i32, %arg1: i32) -> (i32, i32, i32) {
    %c0_i32 = arith.constant 0 : i32
    %c0_i32_0 = arith.constant 0 : i32
    return %arg1, %arg0, %c0_i32 : i32, i32, i32
  }
  func.func @transform_2(%arg0: i32, %arg1: i32) -> (i32, i32) {
    %c0_i32 = arith.constant 0 : i32
    %c0_i32_0 = arith.constant 0 : i32
    %c0_i32_1 = arith.constant 0 : i32
    return %c0_i32, %c0_i32_0 : i32, i32
  }
  func.func @transform_3(%arg0: i32, %arg1: i32) -> (i32, i32) {
    %c0_i32 = arith.constant 0 : i32
    %c0_i32_0 = arith.constant 0 : i32
    %c0_i32_1 = arith.constant 0 : i32
    return %c0_i32, %c0_i32_0 : i32, i32
  }
  func.func @transform_4(%arg0: i32, %arg1: i32) -> (i32, i32) {
    %c0_i32 = arith.constant 0 : i32
    %c0_i32_0 = arith.constant 0 : i32
    %c0_i32_1 = arith.constant 0 : i32
    return %c0_i32, %c0_i32_0 : i32, i32
  }
  func.func @transform_5(%arg0: i32, %arg1: i32) -> (i32, i32) {
    %c0_i32 = arith.constant 0 : i32
    %c0_i32_0 = arith.constant 0 : i32
    %c0_i32_1 = arith.constant 0 : i32
    return %c0_i32, %c0_i32_0 : i32, i32
  }
  func.func @transform_6(%arg0: i32, %arg1: i32) -> (i32, i32) {
    %c0_i32 = arith.constant 0 : i32
    %c0_i32_0 = arith.constant 0 : i32
    %c0_i32_1 = arith.constant 0 : i32
    return %c0_i32, %c0_i32_0 : i32, i32
  }
  func.func @transform_7(%arg0: i32, %arg1: i32) -> (i32, i32) {
    %c0_i32 = arith.constant 0 : i32
    %c0_i32_0 = arith.constant 0 : i32
    %c0_i32_1 = arith.constant 0 : i32
    return %c0_i32, %c0_i32_0 : i32, i32
  }
  func.func @transform_8(%arg0: i32, %arg1: i32) -> (i32, i32) {
    %c0_i32 = arith.constant 0 : i32
    %c0_i32_0 = arith.constant 0 : i32
    return %arg0, %c0_i32 : i32, i32
  }
}

</mosaic_0001>

<llo_original>
// kernel: tile.8
$region0: #{tile.8}
  #allocation0 [shape = 's32[1]{0}', space=sflag, size = 0x4, scoped, tag = 'scoped memory for tile.8']
  %s0 = inlined_call_operand.vmem [shape: s32[3], index: 0, kind: input, shape index: {}]
  %s1 = inlined_call_operand.vmem [shape: s32[3,3], index: 1, kind: output, shape index: {}]
  // Predicated region
  $region2: #{tile.8} parent=0 // pred_check
    _
  $region3: #{tile.8} parent=0 // pred_check_branch
    %3 = sbr.rel (0) target = $region5
  $region4: #{tile.8} parent=0 // pred_region
    _
  $region5: #{tile.8} parent=0 // pred_fallthru
    _
  %v4 = vld [vmem:[%s0] ss:$0 sm:$0xff]
  %5 = vst [vmem:[%s1] sm:$0xf] %v4

// kernel: liif_forward.1
$region0: #{liif_forward.1}
  #allocation0 [shape = 'u32[]', space=smem, size = 0x4, offset = 0x4, fixed_abs, tag = 'smem constant byte address 0x4 - core index']
  #allocation1 [shape = 'u32[72,128]{1,0:T(1,128)}', space=vmem, size = 0x9000, scoped, tag = 'internal scratch']
  %s0 = inlined_call_operand.vmem [shape: bf16[4,512,640], index: 0, kind: input, shape index: {}]
  %s1 = inlined_call_operand.vmem [shape: f32[4,512,1], index: 1, kind: input, shape index: {}]
  %s2 = inlined_call_operand.vmem [shape: bf16[640,256], index: 2, kind: input, shape index: {}]
  %s3 = inlined_call_operand.vmem [shape: f32[1,256], index: 3, kind: input, shape index: {}]
  %s4 = inlined_call_operand.vmem [shape: bf16[256,256], index: 4, kind: input, shape index: {}]
  %s5 = inlined_call_operand.vmem [shape: f32[1,256], index: 5, kind: input, shape index: {}]
  %s6 = inlined_call_operand.vmem [shape: bf16[256,128], index: 6, kind: input, shape index: {}]
  %s7 = inlined_call_operand.vmem [shape: f32[1,128], index: 7, kind: input, shape index: {}]
  %s8 = inlined_call_operand.vmem [shape: f32[512,128], index: 8, kind: output, shape index: {}]
  %s9 = sld [smem:[#allocation0]]
  $region73: #{liif_forward.1} parent=0
    _
  %s11 = ssub.s32 1, %s9
  %s12 = scalar_select 0, %s11, %s9
  loop: start=0, step=1, limit=18
  $region2: #{liif_forward.1} parent=0 // loop_pre_header
    _
  $region3: #{liif_forward.1} parent=0 // loop_header
    %s14 = sphi 0, %s18
    %p15 = scmp.ge.s32.totalorder %s14, 18
    %s21 = sphi 0, %s33
    %s22 = sphi 0, %s29
    %s23 = sphi 0, %s21
    %s24 = sphi 0, %s22
    %s25 = sphi 0, %s23
    %s26 = sphi 0, %s24
    %s38 = sphi 0, %s40
    %s41 = sphi 0, %s38
    %s42 = sphi 0, %s41
    %s58 = sphi 0, %s42
    %s66 = sphi 0, %s68
    %s69 = sphi 0, %s66
    %s70 = sphi 0, %s69
    %s86 = sphi 0, %s70
    %s90 = sphi 0, %s90
    %s92 = sphi 0, %s90
    %s93 = sphi 0, %s92
    %s107 = sphi 0, %s93
    %s111 = sphi 0, %s111
    %s113 = sphi 0, %s111
    %s114 = sphi 0, %s113
    %s128 = sphi 0, %s114
    %s132 = sphi 0, %s132
    %s134 = sphi 0, %s132
    %s135 = sphi 0, %s134
    %s149 = sphi 0, %s135
    %s153 = sphi 0, %s153
    %s155 = sphi 0, %s153
    %s156 = sphi 0, %s155
    %s170 = sphi 0, %s156
    %s174 = sphi 0, %s174
    %s176 = sphi 0, %s174
    %s177 = sphi 0, %s176
    %s191 = sphi 0, %s177
    %s195 = sphi 0, %s195
    %s197 = sphi 0, %s195
    %s198 = sphi 0, %s197
    %s212 = sphi 0, %s198
    %s218 = sphi 0, %s220
    %s221 = sphi 0, %s218
    %s222 = sphi 0, %s221
    %s238 = sphi 0, %s222
  $region4: #{liif_forward.1} parent=0 // loop_header_branch
    %17 = sbr.rel (%p15) target = $region8
  $region5: #{liif_forward.1} parent=0 // loop_body
    %s19 = ssub.s32 %s14, 1
    %s20 = ssub.s32 %s14, 2
    %s27 = sadd.s32 1, %s22
    %p28 = scmp.ge.s32.totalorder %s27, 4
    %s29 = scalar_select %p28, 0, %s27
    %s30 = sadd.s32 1, %s21
    %s31 = scalar_select %p28, %s30, %s21
    %p32 = scmp.ge.s32.totalorder %s31, 4
    %s33 = scalar_select %p32, 0, %s31
    %s34 = ssub.s32 %s22, %s29
    %s35 = ssub.s32 %s21, %s33
    %s36 = sor.u32 %s34, %s35
    %p37 = scmp.eq.s32.totalorder %s36, 0
    %s39 = sadd.s32 %s38, 1
    %s40 = scalar_select %p37, %s38, %s39
    %p43 = pneg %p37
    %p44 = scmp.eq.s32.totalorder %s14, 15
    %p45 = por %p43, %p44
    %p46 = scmp.ne.s32.totalorder %s38, %s41
    %p47 = scmp.eq.s32.totalorder %s14, 0
    %p48 = por %p46, %p47
    %p49 = scmp.ne.s32.totalorder %s38, %s41
    %p50 = scmp.eq.s32.totalorder %s19, 15
    %p51 = por %p49, %p50
    %p52 = scmp.ne.s32.totalorder %s41, %s42
    %p53 = scmp.eq.s32.totalorder %s19, 0
    %p54 = por %p52, %p53
    %p55 = scmp.ne.s32.totalorder %s41, %s42
    %p56 = scmp.eq.s32.totalorder %s20, 15
    %p57 = por %p55, %p56
    %p59 = scmp.ne.s32.totalorder %s42, %s58
    %p60 = scmp.eq.s32.totalorder %s20, 0
    %p61 = por %p59, %p60
    %s62 = ssub.s32 %s22, %s29
    %s63 = ssub.s32 %s21, %s33
    %s64 = sor.u32 %s62, %s63
    %p65 = scmp.eq.s32.totalorder %s64, 0
    %s67 = sadd.s32 %s66, 1
    %s68 = scalar_select %p65, %s66, %s67
    %p71 = pneg %p65
    %p72 = scmp.eq.s32.totalorder %s14, 15
    %p73 = por %p71, %p72
    %p74 = scmp.ne.s32.totalorder %s66, %s69
    %p75 = scmp.eq.s32.totalorder %s14, 0
    %p76 = por %p74, %p75
    %p77 = scmp.ne.s32.totalorder %s66, %s69
    %p78 = scmp.eq.s32.totalorder %s19, 15
    %p79 = por %p77, %p78
    %p80 = scmp.ne.s32.totalorder %s69, %s70
    %p81 = scmp.eq.s32.totalorder %s19, 0
    %p82 = por %p80, %p81
    %p83 = scmp.ne.s32.totalorder %s69, %s70
    %p84 = scmp.eq.s32.totalorder %s20, 15
    %p85 = por %p83, %p84
    %p87 = scmp.ne.s32.totalorder %s70, %s86
    %p88 = scmp.eq.s32.totalorder %s20, 0
    %p89 = por %p87, %p88
    %s91 = sadd.s32 %s90, 1
    %p94 = scmp.eq.s32.totalorder %s14, 15
    %p95 = scmp.ne.s32.totalorder %s90, %s92
    %p96 = scmp.eq.s32.totalorder %s14, 0
    %p97 = por %p95, %p96
    %p98 = scmp.ne.s32.totalorder %s90, %s92
    %p99 = scmp.eq.s32.totalorder %s19, 15
    %p100 = por %p98, %p99
    %p101 = scmp.ne.s32.totalorder %s92, %s93
    %p102 = scmp.eq.s32.totalorder %s19, 0
    %p103 = por %p101, %p102
    %p104 = scmp.ne.s32.totalorder %s92, %s93
    %p105 = scmp.eq.s32.totalorder %s20, 15
    %p106 = por %p104, %p105
    %p108 = scmp.ne.s32.totalorder %s93, %s107
    %p109 = scmp.eq.s32.totalorder %s20, 0
    %p110 = por %p108, %p109
    %s112 = sadd.s32 %s111, 1
    %p115 = scmp.eq.s32.totalorder %s14, 15
    %p116 = scmp.ne.s32.totalorder %s111, %s113
    %p117 = scmp.eq.s32.totalorder %s14, 0
    %p118 = por %p116, %p117
    %p119 = scmp.ne.s32.totalorder %s111, %s113
    %p120 = scmp.eq.s32.totalorder %s19, 15
    %p121 = por %p119, %p120
    %p122 = scmp.ne.s32.totalorder %s113, %s114
    %p123 = scmp.eq.s32.totalorder %s19, 0
    %p124 = por %p122, %p123
    %p125 = scmp.ne.s32.totalorder %s113, %s114
    %p126 = scmp.eq.s32.totalorder %s20, 15
    %p127 = por %p125, %p126
    %p129 = scmp.ne.s32.totalorder %s114, %s128
    %p130 = scmp.eq.s32.totalorder %s20, 0
    %p131 = por %p129, %p130
    %s133 = sadd.s32 %s132, 1
    %p136 = scmp.eq.s32.totalorder %s14, 15
    %p137 = scmp.ne.s32.totalorder %s132, %s134
    %p138 = scmp.eq.s32.totalorder %s14, 0
    %p139 = por %p137, %p138
    %p140 = scmp.ne.s32.totalorder %s132, %s134
    %p141 = scmp.eq.s32.totalorder %s19, 15
    %p142 = por %p140, %p141
    %p143 = scmp.ne.s32.totalorder %s134, %s135
    %p144 = scmp.eq.s32.totalorder %s19, 0
    %p145 = por %p143, %p144
    %p146 = scmp.ne.s32.totalorder %s134, %s135
    %p147 = scmp.eq.s32.totalorder %s20, 15
    %p148 = por %p146, %p147
    %p150 = scmp.ne.s32.totalorder %s135, %s149
    %p151 = scmp.eq.s32.totalorder %s20, 0
    %p152 = por %p150, %p151
    %s154 = sadd.s32 %s153, 1
    %p157 = scmp.eq.s32.totalorder %s14, 15
    %p158 = scmp.ne.s32.totalorder %s153, %s155
    %p159 = scmp.eq.s32.totalorder %s14, 0
    %p160 = por %p158, %p159
    %p161 = scmp.ne.s32.totalorder %s153, %s155
    %p162 = scmp.eq.s32.totalorder %s19, 15
    %p163 = por %p161, %p162
    %p164 = scmp.ne.s32.totalorder %s155, %s156
    %p165 = scmp.eq.s32.totalorder %s19, 0
    %p166 = por %p164, %p165
    %p167 = scmp.ne.s32.totalorder %s155, %s156
    %p168 = scmp.eq.s32.totalorder %s20, 15
    %p169 = por %p167, %p168
    %p171 = scmp.ne.s32.totalorder %s156, %s170
    %p172 = scmp.eq.s32.totalorder %s20, 0
    %p173 = por %p171, %p172
    %s175 = sadd.s32 %s174, 1
    %p178 = scmp.eq.s32.totalorder %s14, 15
    %p179 = scmp.ne.s32.totalorder %s174, %s176
    %p180 = scmp.eq.s32.totalorder %s14, 0
    %p181 = por %p179, %p180
    %p182 = scmp.ne.s32.totalorder %s174, %s176
    %p183 = scmp.eq.s32.totalorder %s19, 15
    %p184 = por %p182, %p183
    %p185 = scmp.ne.s32.totalorder %s176, %s177
    %p186 = scmp.eq.s32.totalorder %s19, 0
    %p187 = por %p185, %p186
    %p188 = scmp.ne.s32.totalorder %s176, %s177
    %p189 = scmp.eq.s32.totalorder %s20, 15
    %p190 = por %p188, %p189
    %p192 = scmp.ne.s32.totalorder %s177, %s191
    %p193 = scmp.eq.s32.totalorder %s20, 0
    %p194 = por %p192, %p193
    %s196 = sadd.s32 %s195, 1
    %p199 = scmp.eq.s32.totalorder %s14, 15
    %p200 = scmp.ne.s32.totalorder %s195, %s197
    %p201 = scmp.eq.s32.totalorder %s14, 0
    %p202 = por %p200, %p201
    %p203 = scmp.ne.s32.totalorder %s195, %s197
    %p204 = scmp.eq.s32.totalorder %s19, 15
    %p205 = por %p203, %p204
    %p206 = scmp.ne.s32.totalorder %s197, %s198
    %p207 = scmp.eq.s32.totalorder %s19, 0
    %p208 = por %p206, %p207
    %p209 = scmp.ne.s32.totalorder %s197, %s198
    %p210 = scmp.eq.s32.totalorder %s20, 15
    %p211 = por %p209, %p210
    %p213 = scmp.ne.s32.totalorder %s198, %s212
    %p214 = scmp.eq.s32.totalorder %s20, 0
    %p215 = por %p213, %p214
    %s216 = ssub.s32 %s21, %s33
    %p217 = scmp.eq.s32.totalorder %s216, 0
    %s219 = sadd.s32 %s218, 1
    %s220 = scalar_select %p217, %s218, %s219
    %p223 = pneg %p217
    %p224 = scmp.eq.s32.totalorder %s14, 15
    %p225 = por %p223, %p224
    %p226 = scmp.ne.s32.totalorder %s218, %s221
    %p227 = scmp.eq.s32.totalorder %s14, 0
    %p228 = por %p226, %p227
    %p229 = scmp.ne.s32.totalorder %s218, %s221
    %p230 = scmp.eq.s32.totalorder %s19, 15
    %p231 = por %p229, %p230
    %p232 = scmp.ne.s32.totalorder %s221, %s222
    %p233 = scmp.eq.s32.totalorder %s19, 0
    %p234 = por %p232, %p233
    %p235 = scmp.ne.s32.totalorder %s221, %s222
    %p236 = scmp.eq.s32.totalorder %s20, 15
    %p237 = por %p235, %p236
    %p239 = scmp.ne.s32.totalorder %s222, %s238
    %p240 = scmp.eq.s32.totalorder %s20, 0
    %p241 = por %p239, %p240
    %p242 = scmp.le.s32.totalorder 1, %s14
    %p243 = scmp.lt.s32.totalorder %s14, 17
    %p244 = pnand %p242, %p243
    %p245 = pneg %p244
    // Predicated region
    $region9: #{liif_forward.1} parent=5 // pred_check
      _
    $region10: #{liif_forward.1} parent=5 // pred_check_branch
      %247 = sbr.rel (%p244) target = $region12
    $region11: #{liif_forward.1} parent=5 // pred_region
      %s248 = ssub.s32 %s14, 1
      // Predicated region
      $region13: #{liif_forward.1} parent=11 // pred_check
        %p249 = pneg %p103
      $region14: #{liif_forward.1} parent=11 // pred_check_branch
        %251 = sbr.rel (%p249) target = $region16
      $region15: #{liif_forward.1} parent=11 // pred_region
        _
      $region16: #{liif_forward.1} parent=11 // pred_fallthru
        _
      // Predicated region
      $region17: #{liif_forward.1} parent=11 // pred_check
        %p252 = pneg %p124
      $region18: #{liif_forward.1} parent=11 // pred_check_branch
        %254 = sbr.rel (%p252) target = $region20
      $region19: #{liif_forward.1} parent=11 // pred_region
        _
      $region20: #{liif_forward.1} parent=11 // pred_fallthru
        _
      // Predicated region
      $region21: #{liif_forward.1} parent=11 // pred_check
        %p255 = pneg %p145
      $region22: #{liif_forward.1} parent=11 // pred_check_branch
        %257 = sbr.rel (%p255) target = $region24
      $region23: #{liif_forward.1} parent=11 // pred_region
        _
      $region24: #{liif_forward.1} parent=11 // pred_fallthru
        _
      // Predicated region
      $region25: #{liif_forward.1} parent=11 // pred_check
        %p258 = pneg %p166
      $region26: #{liif_forward.1} parent=11 // pred_check_branch
        %260 = sbr.rel (%p258) target = $region28
      $region27: #{liif_forward.1} parent=11 // pred_region
        _
      $region28: #{liif_forward.1} parent=11 // pred_fallthru
        _
      // Predicated region
      $region29: #{liif_forward.1} parent=11 // pred_check
        %p261 = pneg %p187
      $region30: #{liif_forward.1} parent=11 // pred_check_branch
        %263 = sbr.rel (%p261) target = $region32
      $region31: #{liif_forward.1} parent=11 // pred_region
        _
      $region32: #{liif_forward.1} parent=11 // pred_fallthru
        _
      // Predicated region
      $region33: #{liif_forward.1} parent=11 // pred_check
        %p264 = pneg %p208
      $region34: #{liif_forward.1} parent=11 // pred_check_branch
        %266 = sbr.rel (%p264) target = $region36
      $region35: #{liif_forward.1} parent=11 // pred_region
        _
      $region36: #{liif_forward.1} parent=11 // pred_fallthru
        _
    $region12: #{liif_forward.1} parent=5 // pred_fallthru
      _
    %p267 = scmp.lt.s32.totalorder %s14, 16
    // Predicated region
    $region37: #{liif_forward.1} parent=5 // pred_check
      %p268 = pneg %p267
    $region38: #{liif_forward.1} parent=5 // pred_check_branch
      %270 = sbr.rel (%p268) target = $region40
    $region39: #{liif_forward.1} parent=5 // pred_region
      // Predicated region
      $region41: #{liif_forward.1} parent=39 // pred_check
        %p271 = pneg %p48
      $region42: #{liif_forward.1} parent=39 // pred_check_branch
        %273 = sbr.rel (%p271) target = $region44
      $region43: #{liif_forward.1} parent=39 // pred_region
        %s274 = smul.u32 16, %s21
        %p275 = scmp.lt.s32.totalorder %s22, 3
        %s276 = scalar_select %p275, %s22, 3
        %p277 = scmp.lt.s32.totalorder %s274, 63
        %s278 = scalar_select %p277, %s274, 63
        %s279 = smul.addr %s278, 5
        %s280 = smul.addr %s276, 320
        %s281 = sadd.s32 %s279, %s280
        %s282 = smul.addr %s281, 4
        %s283 = scalar_lea.vmem %s0, %s282
        %s284 = smul.u32 16, %s21
      $region44: #{liif_forward.1} parent=39 // pred_fallthru
        _
      // Predicated region
      $region45: #{liif_forward.1} parent=39 // pred_check
        %p285 = pneg %p76
      $region46: #{liif_forward.1} parent=39 // pred_check_branch
        %287 = sbr.rel (%p285) target = $region48
      $region47: #{liif_forward.1} parent=39 // pred_region
        %s288 = smul.u32 16, %s21
        %p289 = scmp.lt.s32.totalorder %s22, 3
        %s290 = scalar_select %p289, %s22, 3
        %p291 = scmp.lt.s32.totalorder %s288, 63
        %s292 = scalar_select %p291, %s288, 63
        %s293 = smul.addr %s290, 64
        %s294 = sadd.s32 %s292, %s293
        %s295 = smul.addr %s294, 8
        %s296 = scalar_lea.vmem %s1, %s295
        %s297 = smul.u32 16, %s21
      $region48: #{liif_forward.1} parent=39 // pred_fallthru
        _
    $region40: #{liif_forward.1} parent=5 // pred_fallthru
      _
    %p298 = scmp.le.s32.totalorder 1, %s14
    %p299 = scmp.lt.s32.totalorder %s14, 17
    %p300 = pnand %p298, %p299
    %p301 = pneg %p300
    // Predicated region
    $region49: #{liif_forward.1} parent=5 // pred_check
      _
    $region50: #{liif_forward.1} parent=5 // pred_check_branch
      %303 = sbr.rel (%p300) target = $region52
    $region51: #{liif_forward.1} parent=5 // pred_region
      %s304 = ssub.s32 %s14, 1
      %s305 = smul.u32 16, %s23
      %p306 = scmp.lt.s32.totalorder %s24, 3
      %s307 = scalar_select %p306, %s24, 3
      %p308 = scmp.lt.s32.totalorder %s305, 63
      %s309 = scalar_select %p308, %s305, 63
      %s310 = smul.addr %s309, 5
      %s311 = smul.addr %s307, 320
      %s312 = sadd.s32 %s310, %s311
      %s313 = smul.addr %s312, 4
      %s314 = scalar_lea.vmem %s0, %s313
      %p315 = pneg %p54
      %p316 = pneg %p51
      %s317 = smul.u32 16, %s23
      %p318 = scmp.lt.s32.totalorder %s24, 3
      %s319 = scalar_select %p318, %s24, 3
      %p320 = scmp.lt.s32.totalorder %s317, 63
      %s321 = scalar_select %p320, %s317, 63
      %s322 = smul.addr %s319, 64
      %s323 = sadd.s32 %s321, %s322
      %s324 = smul.addr %s323, 8
      %s325 = scalar_lea.vmem %s1, %s324
      %p326 = pneg %p82
      %p327 = pneg %p79
      %p328 = pneg %p103
      %p329 = pneg %p100
      %p330 = pneg %p124
      %p331 = pneg %p121
      %p332 = pneg %p145
      %p333 = pneg %p142
      %p334 = pneg %p166
      %p335 = pneg %p163
      %p336 = pneg %p187
      %p337 = pneg %p184
      %p338 = pneg %p208
      %p339 = pneg %p205
      %p340 = pneg %p234
      %p341 = pneg %p231
      %s342 = smul.u32 16, %s23
      %p343 = scmp.lt.s32.totalorder %s342, 63
      %s344 = scalar_select %p343, %s342, 63
      %s345 = smul.addr %s344, 8
      %s346 = scalar_lea.vmem %s8, %s345
      %s347 = smul.u32 16, %s23
      %p348 = scmp.lt.s32.totalorder %s24, 3
      %s349 = scalar_select %p348, %s24, 3
      %p350 = scmp.lt.s32.totalorder %s347, 63
      %s351 = scalar_select %p350, %s347, 63
      %s352 = smul.addr %s351, 5
      %s353 = smul.addr %s349, 320
      %s354 = sadd.s32 %s352, %s353
      %s355 = smul.addr %s354, 4
      %s356 = scalar_lea.vmem %s0, %s355
      %s357 = smul.u32 16, %s23
      %s358 = smul.u32 16, %s23
      %p359 = scmp.lt.s32.totalorder %s24, 3
      %s360 = scalar_select %p359, %s24, 3
      %p361 = scmp.lt.s32.totalorder %s358, 63
      %s362 = scalar_select %p361, %s358, 63
      %s363 = smul.addr %s360, 64
      %s364 = sadd.s32 %s362, %s363
      %s365 = smul.addr %s364, 8
      %s366 = scalar_lea.vmem %s1, %s365
      %s367 = smul.u32 16, %s23
      %s368 = smul.u32 16, %s23
      %p369 = scmp.lt.s32.totalorder %s368, 63
      %s370 = scalar_select %p369, %s368, 63
      %s371 = smul.addr %s370, 8
      %s372 = scalar_lea.vmem %s8, %s371
      %s373 = smul.u32 16, %s23
      %v374 = vld [vmem:[%s356] sm:$0xff]
      %v375 = vld [vmem:[%s356 + $0x8] sm:$0xff]
      %v376 = vld [vmem:[%s356 + $0x10] sm:$0xf]
      %v377 = vld [vmem:[%s356 + $0x14] sm:$0xff]
      %v378 = vld [vmem:[%s356 + $0x1c] sm:$0xff]
      %v379 = vld [vmem:[%s356 + $0x24] sm:$0xf]
      %v380 = vld [vmem:[%s356 + $0x28] sm:$0xff]
      %v381 = vld [vmem:[%s356 + $0x30] sm:$0xff]
      %v382 = vld [vmem:[%s356 + $0x38] sm:$0xf]
      %v383 = vld [vmem:[%s356 + $0x3c] sm:$0xff]
      %v384 = vld [vmem:[%s356 + $0x44] sm:$0xff]
      %v385 = vld [vmem:[%s356 + $0x4c] sm:$0xf]
      %v386 = vld [vmem:[%s356 + $0x50] sm:$0xff]
      %v387 = vld [vmem:[%s356 + $0x58] sm:$0xff]
      %v388 = vld [vmem:[%s356 + $0x60] sm:$0xf]
      %v389 = vld [vmem:[%s356 + $0x64] sm:$0xff]
      %v390 = vld [vmem:[%s356 + $0x6c] sm:$0xff]
      %v391 = vld [vmem:[%s356 + $0x74] sm:$0xf]
      %v392 = vld [vmem:[%s356 + $0x78] sm:$0xff]
      %v393 = vld [vmem:[%s356 + $0x80] sm:$0xff]
      %v394 = vld [vmem:[%s356 + $0x88] sm:$0xf]
      %v395 = vld [vmem:[%s356 + $0x8c] sm:$0xff]
      %v396 = vld [vmem:[%s356 + $0x94] sm:$0xff]
      %v397 = vld [vmem:[%s356 + $0x9c] sm:$0xf]
      %v398 = vld [vmem:[%s356 + $0xa0] sm:$0xff]
      %v399 = vld [vmem:[%s356 + $0xa8] sm:$0xff]
      %v400 = vld [vmem:[%s356 + $0xb0] sm:$0xf]
      %v401 = vld [vmem:[%s356 + $0xb4] sm:$0xff]
      %v402 = vld [vmem:[%s356 + $0xbc] sm:$0xff]
      %v403 = vld [vmem:[%s356 + $0xc4] sm:$0xf]
      %v404 = vld [vmem:[%s356 + $0xc8] sm:$0xff]
      %v405 = vld [vmem:[%s356 + $0xd0] sm:$0xff]
      %v406 = vld [vmem:[%s356 + $0xd8] sm:$0xf]
      %v407 = vld [vmem:[%s356 + $0xdc] sm:$0xff]
      %v408 = vld [vmem:[%s356 + $0xe4] sm:$0xff]
      %v409 = vld [vmem:[%s356 + $0xec] sm:$0xf]
      %v410 = vld [vmem:[%s356 + $0xf0] sm:$0xff]
      %v411 = vld [vmem:[%s356 + $0xf8] sm:$0xff]
      %v412 = vld [vmem:[%s356 + $0x100] sm:$0xf]
      %v413 = vld [vmem:[%s356 + $0x104] sm:$0xff]
      %v414 = vld [vmem:[%s356 + $0x10c] sm:$0xff]
      %v415 = vld [vmem:[%s356 + $0x114] sm:$0xf]
      %v416 = vld [vmem:[%s356 + $0x118] sm:$0xff]
      %v417 = vld [vmem:[%s356 + $0x120] sm:$0xff]
      %v418 = vld [vmem:[%s356 + $0x128] sm:$0xf]
      %v419 = vld [vmem:[%s356 + $0x12c] sm:$0xff]
      %v420 = vld [vmem:[%s356 + $0x134] sm:$0xff]
      %v421 = vld [vmem:[%s356 + $0x13c] sm:$0xf]
      %v422 = vld [vmem:[%s2] sm:$0xff]
      %v423 = vld [vmem:[%s2 + $0x8] sm:$0xff]
      %v424 = vld [vmem:[%s2 + $0x10] sm:$0xff]
      %v425 = vld [vmem:[%s2 + $0x18] sm:$0xff]
      %v426 = vld [vmem:[%s2 + $0x20] sm:$0xff]
      %v427 = vld [vmem:[%s2 + $0x28] sm:$0xff]
      %v428 = vld [vmem:[%s2 + $0x30] sm:$0xff]
      %v429 = vld [vmem:[%s2 + $0x38] sm:$0xff]
      %v430 = vld [vmem:[%s2 + $0x40] sm:$0xff]
      %v431 = vld [vmem:[%s2 + $0x48] sm:$0xff]
      %v432 = vld [vmem:[%s2 + $0x50] sm:$0xff]
      %v433 = vld [vmem:[%s2 + $0x58] sm:$0xff]
      %v434 = vld [vmem:[%s2 + $0x60] sm:$0xff]
      %v435 = vld [vmem:[%s2 + $0x68] sm:$0xff]
      %v436 = vld [vmem:[%s2 + $0x70] sm:$0xff]
      %v437 = vld [vmem:[%s2 + $0x78] sm:$0xff]
      %v438 = vld [vmem:[%s2 + $0x80] sm:$0xff]
      %v439 = vld [vmem:[%s2 + $0x88] sm:$0xff]
      %v440 = vld [vmem:[%s2 + $0x90] sm:$0xff]
      %v441 = vld [vmem:[%s2 + $0x98] sm:$0xff]
      %v442 = vld [vmem:[%s2 + $0xa0] sm:$0xff]
      %v443 = vld [vmem:[%s2 + $0xa8] sm:$0xff]
      %v444 = vld [vmem:[%s2 + $0xb0] sm:$0xff]
      %v445 = vld [vmem:[%s2 + $0xb8] sm:$0xff]
      %v446 = vld [vmem:[%s2 + $0xc0] sm:$0xff]
      %v447 = vld [vmem:[%s2 + $0xc8] sm:$0xff]
      %v448 = vld [vmem:[%s2 + $0xd0] sm:$0xff]
      %v449 = vld [vmem:[%s2 + $0xd8] sm:$0xff]
      %v450 = vld [vmem:[%s2 + $0xe0] sm:$0xff]
      %v451 = vld [vmem:[%s2 + $0xe8] sm:$0xff]
      %v452 = vld [vmem:[%s2 + $0xf0] sm:$0xff]
      %v453 = vld [vmem:[%s2 + $0xf8] sm:$0xff]
      %v454 = vld [vmem:[%s2 + $0x100] sm:$0xff]
      %v455 = vld [vmem:[%s2 + $0x108] sm:$0xff]
      %v456 = vld [vmem:[%s2 + $0x110] sm:$0xff]
      %v457 = vld [vmem:[%s2 + $0x118] sm:$0xff]
      %v458 = vld [vmem:[%s2 + $0x120] sm:$0xff]
      %v459 = vld [vmem:[%s2 + $0x128] sm:$0xff]
      %v460 = vld [vmem:[%s2 + $0x130] sm:$0xff]
      %v461 = vld [vmem:[%s2 + $0x138] sm:$0xff]
      %v462 = vld [vmem:[%s2 + $0x140] sm:$0xff]
      %v463 = vld [vmem:[%s2 + $0x148] sm:$0xff]
      %v464 = vld [vmem:[%s2 + $0x150] sm:$0xff]
      %v465 = vld [vmem:[%s2 + $0x158] sm:$0xff]
      %v466 = vld [vmem:[%s2 + $0x160] sm:$0xff]
      %v467 = vld [vmem:[%s2 + $0x168] sm:$0xff]
      %v468 = vld [vmem:[%s2 + $0x170] sm:$0xff]
      %v469 = vld [vmem:[%s2 + $0x178] sm:$0xff]
      %v470 = vld [vmem:[%s2 + $0x180] sm:$0xff]
      %v471 = vld [vmem:[%s2 + $0x188] sm:$0xff]
      %v472 = vld [vmem:[%s2 + $0x190] sm:$0xff]
      %v473 = vld [vmem:[%s2 + $0x198] sm:$0xff]
      %v474 = vld [vmem:[%s2 + $0x1a0] sm:$0xff]
      %v475 = vld [vmem:[%s2 + $0x1a8] sm:$0xff]
      %v476 = vld [vmem:[%s2 + $0x1b0] sm:$0xff]
      %v477 = vld [vmem:[%s2 + $0x1b8] sm:$0xff]
      %v478 = vld [vmem:[%s2 + $0x1c0] sm:$0xff]
      %v479 = vld [vmem:[%s2 + $0x1c8] sm:$0xff]
      %v480 = vld [vmem:[%s2 + $0x1d0] sm:$0xff]
      %v481 = vld [vmem:[%s2 + $0x1d8] sm:$0xff]
      %v482 = vld [vmem:[%s2 + $0x1e0] sm:$0xff]
      %v483 = vld [vmem:[%s2 + $0x1e8] sm:$0xff]
      %v484 = vld [vmem:[%s2 + $0x1f0] sm:$0xff]
      %v485 = vld [vmem:[%s2 + $0x1f8] sm:$0xff]
      %v486 = vld [vmem:[%s2 + $0x200] sm:$0xff]
      %v487 = vld [vmem:[%s2 + $0x208] sm:$0xff]
      %v488 = vld [vmem:[%s2 + $0x210] sm:$0xff]
      %v489 = vld [vmem:[%s2 + $0x218] sm:$0xff]
      %v490 = vld [vmem:[%s2 + $0x220] sm:$0xff]
      %v491 = vld [vmem:[%s2 + $0x228] sm:$0xff]
      %v492 = vld [vmem:[%s2 + $0x230] sm:$0xff]
      %v493 = vld [vmem:[%s2 + $0x238] sm:$0xff]
      %v494 = vld [vmem:[%s2 + $0x240] sm:$0xff]
      %v495 = vld [vmem:[%s2 + $0x248] sm:$0xff]
      %v496 = vld [vmem:[%s2 + $0x250] sm:$0xff]
      %v497 = vld [vmem:[%s2 + $0x258] sm:$0xff]
      %v498 = vld [vmem:[%s2 + $0x260] sm:$0xff]
      %v499 = vld [vmem:[%s2 + $0x268] sm:$0xff]
      %v500 = vld [vmem:[%s2 + $0x270] sm:$0xff]
      %v501 = vld [vmem:[%s2 + $0x278] sm:$0xff]
      %v502 = vld [vmem:[%s3] sm:$0x3]
      %v504 = vperm.slane %v502, 0
      %v505 = vperm.slane %v502, 1
      %v556 = vunpack.c.l.b16 %v374
      %v557 = vunpack.c.h.b16 %v374
      %v558 = vunpack.c.l.b16 %v375
      %v559 = vunpack.c.h.b16 %v375
      %v560 = vunpack.c.l.b16 %v376
      %v561 = vunpack.c.l.b16 %v377
      %v562 = vunpack.c.h.b16 %v377
      %v563 = vunpack.c.l.b16 %v378
      %v564 = vunpack.c.h.b16 %v378
      %v565 = vunpack.c.l.b16 %v379
      %v566 = vunpack.c.l.b16 %v380
      %v567 = vunpack.c.h.b16 %v380
      %v568 = vunpack.c.l.b16 %v381
      %v569 = vunpack.c.h.b16 %v381
      %v570 = vunpack.c.l.b16 %v382
      %v571 = vunpack.c.l.b16 %v383
      %v572 = vunpack.c.h.b16 %v383
      %v573 = vunpack.c.l.b16 %v384
      %v574 = vunpack.c.h.b16 %v384
      %v575 = vunpack.c.l.b16 %v385
      %v576 = vunpack.c.l.b16 %v386
      %v577 = vunpack.c.h.b16 %v386
      %v578 = vunpack.c.l.b16 %v387
      %v579 = vunpack.c.h.b16 %v387
      %v580 = vunpack.c.l.b16 %v388
      %v581 = vunpack.c.l.b16 %v389
      %v582 = vunpack.c.h.b16 %v389
      %v583 = vunpack.c.l.b16 %v390
      %v584 = vunpack.c.h.b16 %v390
      %v585 = vunpack.c.l.b16 %v391
      %v586 = vunpack.c.l.b16 %v392
      %v587 = vunpack.c.h.b16 %v392
      %v588 = vunpack.c.l.b16 %v393
      %v589 = vunpack.c.h.b16 %v393
      %v590 = vunpack.c.l.b16 %v394
      %v591 = vunpack.c.l.b16 %v395
      %v592 = vunpack.c.h.b16 %v395
      %v593 = vunpack.c.l.b16 %v396
      %v594 = vunpack.c.h.b16 %v396
      %v595 = vunpack.c.l.b16 %v397
      %v596 = vunpack.c.l.b16 %v398
      %v597 = vunpack.c.h.b16 %v398
      %v598 = vunpack.c.l.b16 %v399
      %v599 = vunpack.c.h.b16 %v399
      %v600 = vunpack.c.l.b16 %v400
      %v601 = vunpack.c.l.b16 %v401
      %v602 = vunpack.c.h.b16 %v401
      %v603 = vunpack.c.l.b16 %v402
      %v604 = vunpack.c.h.b16 %v402
      %v605 = vunpack.c.l.b16 %v403
      %v606 = vunpack.c.l.b16 %v404
      %v607 = vunpack.c.h.b16 %v404
      %v608 = vunpack.c.l.b16 %v405
      %v609 = vunpack.c.h.b16 %v405
      %v610 = vunpack.c.l.b16 %v406
      %v611 = vunpack.c.l.b16 %v407
      %v612 = vunpack.c.h.b16 %v407
      %v613 = vunpack.c.l.b16 %v408
      %v614 = vunpack.c.h.b16 %v408
      %v615 = vunpack.c.l.b16 %v409
      %v616 = vunpack.c.l.b16 %v410
      %v617 = vunpack.c.h.b16 %v410
      %v618 = vunpack.c.l.b16 %v411
      %v619 = vunpack.c.h.b16 %v411
      %v620 = vunpack.c.l.b16 %v412
      %v621 = vunpack.c.l.b16 %v413
      %v622 = vunpack.c.h.b16 %v413
      %v623 = vunpack.c.l.b16 %v414
      %v624 = vunpack.c.h.b16 %v414
      %v625 = vunpack.c.l.b16 %v415
      %v626 = vunpack.c.l.b16 %v416
      %v627 = vunpack.c.h.b16 %v416
      %v628 = vunpack.c.l.b16 %v417
      %v629 = vunpack.c.h.b16 %v417
      %v630 = vunpack.c.l.b16 %v418
      %v631 = vunpack.c.l.b16 %v419
      %v632 = vunpack.c.h.b16 %v419
      %v633 = vunpack.c.l.b16 %v420
      %v634 = vunpack.c.h.b16 %v420
      %v635 = vunpack.c.l.b16 %v421
      %v636 = vpack.c.b16 %v561, %v556
      %v637 = vpack.c.b16 %v562, %v557
      %v638 = vpack.c.b16 %v563, %v558
      %v639 = vpack.c.b16 %v564, %v559
      %v640 = vpack.c.b16 %v565, %v560
      %v641 = vpack.c.b16 %v571, %v566
      %v642 = vpack.c.b16 %v572, %v567
      %v643 = vpack.c.b16 %v573, %v568
      %v644 = vpack.c.b16 %v574, %v569
      %v645 = vpack.c.b16 %v575, %v570
      %v646 = vpack.c.b16 %v581, %v576
      %v647 = vpack.c.b16 %v582, %v577
      %v648 = vpack.c.b16 %v583, %v578
      %v649 = vpack.c.b16 %v584, %v579
      %v650 = vpack.c.b16 %v585, %v580
      %v651 = vpack.c.b16 %v591, %v586
      %v652 = vpack.c.b16 %v592, %v587
      %v653 = vpack.c.b16 %v593, %v588
      %v654 = vpack.c.b16 %v594, %v589
      %v655 = vpack.c.b16 %v595, %v590
      %v656 = vpack.c.b16 %v601, %v596
      %v657 = vpack.c.b16 %v602, %v597
      %v658 = vpack.c.b16 %v603, %v598
      %v659 = vpack.c.b16 %v604, %v599
      %v660 = vpack.c.b16 %v605, %v600
      %v661 = vpack.c.b16 %v611, %v606
      %v662 = vpack.c.b16 %v612, %v607
      %v663 = vpack.c.b16 %v613, %v608
      %v664 = vpack.c.b16 %v614, %v609
      %v665 = vpack.c.b16 %v615, %v610
      %v666 = vpack.c.b16 %v621, %v616
      %v667 = vpack.c.b16 %v622, %v617
      %v668 = vpack.c.b16 %v623, %v618
      %v669 = vpack.c.b16 %v624, %v619
      %v670 = vpack.c.b16 %v625, %v620
      %v671 = vpack.c.b16 %v631, %v626
      %v672 = vpack.c.b16 %v632, %v627
      %v673 = vpack.c.b16 %v633, %v628
      %v674 = vpack.c.b16 %v634, %v629
      %v675 = vpack.c.b16 %v635, %v630
      %v796 = vunpack.c.l.b16 %v422
      %v797 = vunpack.c.h.b16 %v422
      %v798 = vunpack.c.l.b16 %v423
      %v799 = vunpack.c.h.b16 %v423
      %v800 = vunpack.c.l.b16 %v424
      %v801 = vunpack.c.h.b16 %v424
      %v802 = vunpack.c.l.b16 %v425
      %v803 = vunpack.c.h.b16 %v425
      %v804 = vunpack.c.l.b16 %v426
      %v805 = vunpack.c.h.b16 %v426
      %v806 = vunpack.c.l.b16 %v427
      %v807 = vunpack.c.h.b16 %v427
      %v808 = vunpack.c.l.b16 %v428
      %v809 = vunpack.c.h.b16 %v428
      %v810 = vunpack.c.l.b16 %v429
      %v811 = vunpack.c.h.b16 %v429
      %v812 = vunpack.c.l.b16 %v430
      %v813 = vunpack.c.h.b16 %v430
      %v814 = vunpack.c.l.b16 %v431
      %v815 = vunpack.c.h.b16 %v431
      %v816 = vunpack.c.l.b16 %v432
      %v817 = vunpack.c.h.b16 %v432
      %v818 = vunpack.c.l.b16 %v433
      %v819 = vunpack.c.h.b16 %v433
      %v820 = vunpack.c.l.b16 %v434
      %v821 = vunpack.c.h.b16 %v434
      %v822 = vunpack.c.l.b16 %v435
      %v823 = vunpack.c.h.b16 %v435
      %v824 = vunpack.c.l.b16 %v436
      %v825 = vunpack.c.h.b16 %v436
      %v826 = vunpack.c.l.b16 %v437
      %v827 = vunpack.c.h.b16 %v437
      %v828 = vunpack.c.l.b16 %v438
      %v829 = vunpack.c.h.b16 %v438
      %v830 = vunpack.c.l.b16 %v439
      %v831 = vunpack.c.h.b16 %v439
      %v832 = vunpack.c.l.b16 %v440
      %v833 = vunpack.c.h.b16 %v440
      %v834 = vunpack.c.l.b16 %v441
      %v835 = vunpack.c.h.b16 %v441
      %v836 = vunpack.c.l.b16 %v442
      %v837 = vunpack.c.h.b16 %v442
      %v838 = vunpack.c.l.b16 %v443
      %v839 = vunpack.c.h.b16 %v443
      %v840 = vunpack.c.l.b16 %v444
      %v841 = vunpack.c.h.b16 %v444
      %v842 = vunpack.c.l.b16 %v445
      %v843 = vunpack.c.h.b16 %v445
      %v844 = vunpack.c.l.b16 %v446
      %v845 = vunpack.c.h.b16 %v446
      %v846 = vunpack.c.l.b16 %v447
      %v847 = vunpack.c.h.b16 %v447
      %v848 = vunpack.c.l.b16 %v448
      %v849 = vunpack.c.h.b16 %v448
      %v850 = vunpack.c.l.b16 %v449
      %v851 = vunpack.c.h.b16 %v449
      %v852 = vunpack.c.l.b16 %v450
      %v853 = vunpack.c.h.b16 %v450
      %v854 = vunpack.c.l.b16 %v451
      %v855 = vunpack.c.h.b16 %v451
      %v856 = vunpack.c.l.b16 %v452
      %v857 = vunpack.c.h.b16 %v452
      %v858 = vunpack.c.l.b16 %v453
      %v859 = vunpack.c.h.b16 %v453
      %v860 = vunpack.c.l.b16 %v454
      %v861 = vunpack.c.h.b16 %v454
      %v862 = vunpack.c.l.b16 %v455
      %v863 = vunpack.c.h.b16 %v455
      %v864 = vunpack.c.l.b16 %v456
      %v865 = vunpack.c.h.b16 %v456
      %v866 = vunpack.c.l.b16 %v457
      %v867 = vunpack.c.h.b16 %v457
      %v868 = vunpack.c.l.b16 %v458
      %v869 = vunpack.c.h.b16 %v458
      %v870 = vunpack.c.l.b16 %v459
      %v871 = vunpack.c.h.b16 %v459
      %v872 = vunpack.c.l.b16 %v460
      %v873 = vunpack.c.h.b16 %v460
      %v874 = vunpack.c.l.b16 %v461
      %v875 = vunpack.c.h.b16 %v461
      %v876 = vunpack.c.l.b16 %v462
      %v877 = vunpack.c.h.b16 %v462
      %v878 = vunpack.c.l.b16 %v463
      %v879 = vunpack.c.h.b16 %v463
      %v880 = vunpack.c.l.b16 %v464
      %v881 = vunpack.c.h.b16 %v464
      %v882 = vunpack.c.l.b16 %v465
      %v883 = vunpack.c.h.b16 %v465
      %v884 = vunpack.c.l.b16 %v466
      %v885 = vunpack.c.h.b16 %v466
      %v886 = vunpack.c.l.b16 %v467
      %v887 = vunpack.c.h.b16 %v467
      %v888 = vunpack.c.l.b16 %v468
      %v889 = vunpack.c.h.b16 %v468
      %v890 = vunpack.c.l.b16 %v469
      %v891 = vunpack.c.h.b16 %v469
      %v892 = vunpack.c.l.b16 %v470
      %v893 = vunpack.c.h.b16 %v470
      %v894 = vunpack.c.l.b16 %v471
      %v895 = vunpack.c.h.b16 %v471
      %v896 = vunpack.c.l.b16 %v472
      %v897 = vunpack.c.h.b16 %v472
      %v898 = vunpack.c.l.b16 %v473
      %v899 = vunpack.c.h.b16 %v473
      %v900 = vunpack.c.l.b16 %v474
      %v901 = vunpack.c.h.b16 %v474
      %v902 = vunpack.c.l.b16 %v475
      %v903 = vunpack.c.h.b16 %v475
      %v904 = vunpack.c.l.b16 %v476
      %v905 = vunpack.c.h.b16 %v476
      %v906 = vunpack.c.l.b16 %v477
      %v907 = vunpack.c.h.b16 %v477
      %v908 = vunpack.c.l.b16 %v478
      %v909 = vunpack.c.h.b16 %v478
      %v910 = vunpack.c.l.b16 %v479
      %v911 = vunpack.c.h.b16 %v479
      %v912 = vunpack.c.l.b16 %v480
      %v913 = vunpack.c.h.b16 %v480
      %v914 = vunpack.c.l.b16 %v481
      %v915 = vunpack.c.h.b16 %v481
      %v916 = vunpack.c.l.b16 %v482
      %v917 = vunpack.c.h.b16 %v482
      %v918 = vunpack.c.l.b16 %v483
      %v919 = vunpack.c.h.b16 %v483
      %v920 = vunpack.c.l.b16 %v484
      %v921 = vunpack.c.h.b16 %v484
      %v922 = vunpack.c.l.b16 %v485
      %v923 = vunpack.c.h.b16 %v485
      %v924 = vunpack.c.l.b16 %v486
      %v925 = vunpack.c.h.b16 %v486
      %v926 = vunpack.c.l.b16 %v487
      %v927 = vunpack.c.h.b16 %v487
      %v928 = vunpack.c.l.b16 %v488
      %v929 = vunpack.c.h.b16 %v488
      %v930 = vunpack.c.l.b16 %v489
      %v931 = vunpack.c.h.b16 %v489
      %v932 = vunpack.c.l.b16 %v490
      %v933 = vunpack.c.h.b16 %v490
      %v934 = vunpack.c.l.b16 %v491
      %v935 = vunpack.c.h.b16 %v491
      %v936 = vunpack.c.l.b16 %v492
      %v937 = vunpack.c.h.b16 %v492
      %v938 = vunpack.c.l.b16 %v493
      %v939 = vunpack.c.h.b16 %v493
      %v940 = vunpack.c.l.b16 %v494
      %v941 = vunpack.c.h.b16 %v494
      %v942 = vunpack.c.l.b16 %v495
      %v943 = vunpack.c.h.b16 %v495
      %v944 = vunpack.c.l.b16 %v496
      %v945 = vunpack.c.h.b16 %v496
      %v946 = vunpack.c.l.b16 %v497
      %v947 = vunpack.c.h.b16 %v497
      %v948 = vunpack.c.l.b16 %v498
      %v949 = vunpack.c.h.b16 %v498
      %v950 = vunpack.c.l.b16 %v499
      %v951 = vunpack.c.h.b16 %v499
      %v952 = vunpack.c.l.b16 %v500
      %v953 = vunpack.c.h.b16 %v500
      %v954 = vunpack.c.l.b16 %v501
      %v955 = vunpack.c.h.b16 %v501
      %v956 = vpack.c.b16 %v798, %v796
      %v957 = vpack.c.b16 %v799, %v797
      %v958 = vpack.c.b16 %v802, %v800
      %v959 = vpack.c.b16 %v803, %v801
      %v960 = vpack.c.b16 %v806, %v804
      %v961 = vpack.c.b16 %v807, %v805
      %v962 = vpack.c.b16 %v810, %v808
      %v963 = vpack.c.b16 %v811, %v809
      %v964 = vpack.c.b16 %v814, %v812
      %v965 = vpack.c.b16 %v815, %v813
      %v966 = vpack.c.b16 %v818, %v816
      %v967 = vpack.c.b16 %v819, %v817
      %v968 = vpack.c.b16 %v822, %v820
      %v969 = vpack.c.b16 %v823, %v821
      %v970 = vpack.c.b16 %v826, %v824
      %v971 = vpack.c.b16 %v827, %v825
      %v972 = vpack.c.b16 %v830, %v828
      %v973 = vpack.c.b16 %v831, %v829
      %v974 = vpack.c.b16 %v834, %v832
      %v975 = vpack.c.b16 %v835, %v833
      %v976 = vpack.c.b16 %v838, %v836
      %v977 = vpack.c.b16 %v839, %v837
      %v978 = vpack.c.b16 %v842, %v840
      %v979 = vpack.c.b16 %v843, %v841
      %v980 = vpack.c.b16 %v846, %v844
      %v981 = vpack.c.b16 %v847, %v845
      %v982 = vpack.c.b16 %v850, %v848
      %v983 = vpack.c.b16 %v851, %v849
      %v984 = vpack.c.b16 %v854, %v852
      %v985 = vpack.c.b16 %v855, %v853
      %v986 = vpack.c.b16 %v858, %v856
      %v987 = vpack.c.b16 %v859, %v857
      %v988 = vpack.c.b16 %v862, %v860
      %v989 = vpack.c.b16 %v863, %v861
      %v990 = vpack.c.b16 %v866, %v864
      %v991 = vpack.c.b16 %v867, %v865
      %v992 = vpack.c.b16 %v870, %v868
      %v993 = vpack.c.b16 %v871, %v869
      %v994 = vpack.c.b16 %v874, %v872
      %v995 = vpack.c.b16 %v875, %v873
      %v996 = vpack.c.b16 %v878, %v876
      %v997 = vpack.c.b16 %v879, %v877
      %v998 = vpack.c.b16 %v882, %v880
      %v999 = vpack.c.b16 %v883, %v881
      %v1000 = vpack.c.b16 %v886, %v884
      %v1001 = vpack.c.b16 %v887, %v885
      %v1002 = vpack.c.b16 %v890, %v888
      %v1003 = vpack.c.b16 %v891, %v889
      %v1004 = vpack.c.b16 %v894, %v892
      %v1005 = vpack.c.b16 %v895, %v893
      %v1006 = vpack.c.b16 %v898, %v896
      %v1007 = vpack.c.b16 %v899, %v897
      %v1008 = vpack.c.b16 %v902, %v900
      %v1009 = vpack.c.b16 %v903, %v901
      %v1010 = vpack.c.b16 %v906, %v904
      %v1011 = vpack.c.b16 %v907, %v905
      %v1012 = vpack.c.b16 %v910, %v908
      %v1013 = vpack.c.b16 %v911, %v909
      %v1014 = vpack.c.b16 %v914, %v912
      %v1015 = vpack.c.b16 %v915, %v913
      %v1016 = vpack.c.b16 %v918, %v916
      %v1017 = vpack.c.b16 %v919, %v917
      %v1018 = vpack.c.b16 %v922, %v920
      %v1019 = vpack.c.b16 %v923, %v921
      %v1020 = vpack.c.b16 %v926, %v924
      %v1021 = vpack.c.b16 %v927, %v925
      %v1022 = vpack.c.b16 %v930, %v928
      %v1023 = vpack.c.b16 %v931, %v929
      %v1024 = vpack.c.b16 %v934, %v932
      %v1025 = vpack.c.b16 %v935, %v933
      %v1026 = vpack.c.b16 %v938, %v936
      %v1027 = vpack.c.b16 %v939, %v937
      %v1028 = vpack.c.b16 %v942, %v940
      %v1029 = vpack.c.b16 %v943, %v941
      %v1030 = vpack.c.b16 %v946, %v944
      %v1031 = vpack.c.b16 %v947, %v945
      %v1032 = vpack.c.b16 %v950, %v948
      %v1033 = vpack.c.b16 %v951, %v949
      %v1034 = vpack.c.b16 %v954, %v952
      %v1035 = vpack.c.b16 %v955, %v953
      %1116 = vmatpush.bf16.msra.mxu0 %v970
      %1117 = vmatpush.bf16.msra.mxu0 %v968
      %1118 = vmatpush.bf16.msra.mxu0 %v966
      %1119 = vmatpush.bf16.msra.mxu0 %v964
      %1120 = vmatpush.bf16.msra.mxu0 %v962
      %1121 = vmatpush.bf16.msra.mxu0 %v960
      %1122 = vmatpush.bf16.msra.mxu0 %v958
      %1123 = vmatpush.bf16.msra.mxu0 %v956
      %1124 = vmatmul.bf16.gmra.mxu0 %v636
      %v1125 = vpop.f32.mrf.mxu0
      %v1126 = vadd.f32 %v504, %v1125
      %v1127 = vpop.f32.mrf.mxu0
      %v1128 = vadd.f32 %v504, %v1127
      %1129 = vmatmul.bf16.gmra.mxu0 %v641
      %v1130 = vpop.f32.mrf.mxu0
      %v1131 = vadd.f32 %v504, %v1130
      %v1132 = vpop.f32.mrf.mxu0
      %v1133 = vadd.f32 %v504, %v1132
      %1134 = vmatmul.bf16.gmra.mxu0 %v646
      %v1135 = vpop.f32.mrf.mxu0
      %v1136 = vadd.f32 %v504, %v1135
      %v1137 = vpop.f32.mrf.mxu0
      %v1138 = vadd.f32 %v504, %v1137
      %1139 = vmatmul.bf16.gmra.mxu0 %v651
      %v1140 = vpop.f32.mrf.mxu0
      %v1141 = vadd.f32 %v504, %v1140
      %v1142 = vpop.f32.mrf.mxu0
      %v1143 = vadd.f32 %v504, %v1142
      %1144 = vmatmul.bf16.gmra.mxu0 %v656
      %v1145 = vpop.f32.mrf.mxu0
      %v1146 = vadd.f32 %v504, %v1145
      %v1147 = vpop.f32.mrf.mxu0
      %v1148 = vadd.f32 %v504, %v1147
      %1149 = vmatmul.bf16.gmra.mxu0 %v661
      %v1150 = vpop.f32.mrf.mxu0
      %v1151 = vadd.f32 %v504, %v1150
      %v1152 = vpop.f32.mrf.mxu0
      %v1153 = vadd.f32 %v504, %v1152
      %1154 = vmatmul.bf16.gmra.mxu0 %v666
      %v1155 = vpop.f32.mrf.mxu0
      %v1156 = vadd.f32 %v504, %v1155
      %v1157 = vpop.f32.mrf.mxu0
      %v1158 = vadd.f32 %v504, %v1157
      %1159 = vmatmul.bf16.gmra.mxu0 %v671
      %v1160 = vpop.f32.mrf.mxu0
      %v1161 = vadd.f32 %v504, %v1160
      %v1162 = vpop.f32.mrf.mxu0
      %v1163 = vadd.f32 %v504, %v1162
      %1164 = vdwg.mxu0
      %1165 = vmatpush.bf16.msra.mxu0 %v986
      %1166 = vmatpush.bf16.msra.mxu0 %v984
      %1167 = vmatpush.bf16.msra.mxu0 %v982
      %1168 = vmatpush.bf16.msra.mxu0 %v980
      %1169 = vmatpush.bf16.msra.mxu0 %v978
      %1170 = vmatpush.bf16.msra.mxu0 %v976
      %1171 = vmatpush.bf16.msra.mxu0 %v974
      %1172 = vmatpush.bf16.msra.mxu0 %v972
      %1173 = vmatmul.bf16.gmra.mxu0 %v637
      %v1174 = vpop.f32.mrf.mxu0
      %v1175 = vadd.f32 %v1126, %v1174
      %v1176 = vpop.f32.mrf.mxu0
      %v1177 = vadd.f32 %v1128, %v1176
      %1178 = vmatmul.bf16.gmra.mxu0 %v642
      %v1179 = vpop.f32.mrf.mxu0
      %v1180 = vadd.f32 %v1131, %v1179
      %v1181 = vpop.f32.mrf.mxu0
      %v1182 = vadd.f32 %v1133, %v1181
      %1183 = vmatmul.bf16.gmra.mxu0 %v647
      %v1184 = vpop.f32.mrf.mxu0
      %v1185 = vadd.f32 %v1136, %v1184
      %v1186 = vpop.f32.mrf.mxu0
      %v1187 = vadd.f32 %v1138, %v1186
      %1188 = vmatmul.bf16.gmra.mxu0 %v652
      %v1189 = vpop.f32.mrf.mxu0
      %v1190 = vadd.f32 %v1141, %v1189
      %v1191 = vpop.f32.mrf.mxu0
      %v1192 = vadd.f32 %v1143, %v1191
      %1193 = vmatmul.bf16.gmra.mxu0 %v657
      %v1194 = vpop.f32.mrf.mxu0
      %v1195 = vadd.f32 %v1146, %v1194
      %v1196 = vpop.f32.mrf.mxu0
      %v1197 = vadd.f32 %v1148, %v1196
      %1198 = vmatmul.bf16.gmra.mxu0 %v662
      %v1199 = vpop.f32.mrf.mxu0
      %v1200 = vadd.f32 %v1151, %v1199
      %v1201 = vpop.f32.mrf.mxu0
      %v1202 = vadd.f32 %v1153, %v1201
      %1203 = vmatmul.bf16.gmra.mxu0 %v667
      %v1204 = vpop.f32.mrf.mxu0
      %v1205 = vadd.f32 %v1156, %v1204
      %v1206 = vpop.f32.mrf.mxu0
      %v1207 = vadd.f32 %v1158, %v1206
      %1208 = vmatmul.bf16.gmra.mxu0 %v672
      %v1209 = vpop.f32.mrf.mxu0
      %v1210 = vadd.f32 %v1161, %v1209
      %v1211 = vpop.f32.mrf.mxu0
      %v1212 = vadd.f32 %v1163, %v1211
      %1213 = vdwg.mxu0
      %1214 = vmatpush.bf16.msra.mxu0 %v1002
      %1215 = vmatpush.bf16.msra.mxu0 %v1000
      %1216 = vmatpush.bf16.msra.mxu0 %v998
      %1217 = vmatpush.bf16.msra.mxu0 %v996
      %1218 = vmatpush.bf16.msra.mxu0 %v994
      %1219 = vmatpush.bf16.msra.mxu0 %v992
      %1220 = vmatpush.bf16.msra.mxu0 %v990
      %1221 = vmatpush.bf16.msra.mxu0 %v988
      %1222 = vmatmul.bf16.gmra.mxu0 %v638
      %v1223 = vpop.f32.mrf.mxu0
      %v1224 = vadd.f32 %v1175, %v1223
      %v1225 = vpop.f32.mrf.mxu0
      %v1226 = vadd.f32 %v1177, %v1225
      %1227 = vmatmul.bf16.gmra.mxu0 %v643
      %v1228 = vpop.f32.mrf.mxu0
      %v1229 = vadd.f32 %v1180, %v1228
      %v1230 = vpop.f32.mrf.mxu0
      %v1231 = vadd.f32 %v1182, %v1230
      %1232 = vmatmul.bf16.gmra.mxu0 %v648
      %v1233 = vpop.f32.mrf.mxu0
      %v1234 = vadd.f32 %v1185, %v1233
      %v1235 = vpop.f32.mrf.mxu0
      %v1236 = vadd.f32 %v1187, %v1235
      %1237 = vmatmul.bf16.gmra.mxu0 %v653
      %v1238 = vpop.f32.mrf.mxu0
      %v1239 = vadd.f32 %v1190, %v1238
      %v1240 = vpop.f32.mrf.mxu0
      %v1241 = vadd.f32 %v1192, %v1240
      %1242 = vmatmul.bf16.gmra.mxu0 %v658
      %v1243 = vpop.f32.mrf.mxu0
      %v1244 = vadd.f32 %v1195, %v1243
      %v1245 = vpop.f32.mrf.mxu0
      %v1246 = vadd.f32 %v1197, %v1245
      %1247 = vmatmul.bf16.gmra.mxu0 %v663
      %v1248 = vpop.f32.mrf.mxu0
      %v1249 = vadd.f32 %v1200, %v1248
      %v1250 = vpop.f32.mrf.mxu0
      %v1251 = vadd.f32 %v1202, %v1250
      %1252 = vmatmul.bf16.gmra.mxu0 %v668
      %v1253 = vpop.f32.mrf.mxu0
      %v1254 = vadd.f32 %v1205, %v1253
      %v1255 = vpop.f32.mrf.mxu0
      %v1256 = vadd.f32 %v1207, %v1255
      %1257 = vmatmul.bf16.gmra.mxu0 %v673
      %v1258 = vpop.f32.mrf.mxu0
      %v1259 = vadd.f32 %v1210, %v1258
      %v1260 = vpop.f32.mrf.mxu0
      %v1261 = vadd.f32 %v1212, %v1260
      %1262 = vdwg.mxu0
      %1263 = vmatpush.bf16.msra.mxu0 %v1018
      %1264 = vmatpush.bf16.msra.mxu0 %v1016
      %1265 = vmatpush.bf16.msra.mxu0 %v1014
      %1266 = vmatpush.bf16.msra.mxu0 %v1012
      %1267 = vmatpush.bf16.msra.mxu0 %v1010
      %1268 = vmatpush.bf16.msra.mxu0 %v1008
      %1269 = vmatpush.bf16.msra.mxu0 %v1006
      %1270 = vmatpush.bf16.msra.mxu0 %v1004
      %1271 = vmatmul.bf16.gmra.mxu0 %v639
      %v1272 = vpop.f32.mrf.mxu0
      %v1273 = vadd.f32 %v1224, %v1272
      %v1274 = vpop.f32.mrf.mxu0
      %v1275 = vadd.f32 %v1226, %v1274
      %1276 = vmatmul.bf16.gmra.mxu0 %v644
      %v1277 = vpop.f32.mrf.mxu0
      %v1278 = vadd.f32 %v1229, %v1277
      %v1279 = vpop.f32.mrf.mxu0
      %v1280 = vadd.f32 %v1231, %v1279
      %1281 = vmatmul.bf16.gmra.mxu0 %v649
      %v1282 = vpop.f32.mrf.mxu0
      %v1283 = vadd.f32 %v1234, %v1282
      %v1284 = vpop.f32.mrf.mxu0
      %v1285 = vadd.f32 %v1236, %v1284
      %1286 = vmatmul.bf16.gmra.mxu0 %v654
      %v1287 = vpop.f32.mrf.mxu0
      %v1288 = vadd.f32 %v1239, %v1287
      %v1289 = vpop.f32.mrf.mxu0
      %v1290 = vadd.f32 %v1241, %v1289
      %1291 = vmatmul.bf16.gmra.mxu0 %v659
      %v1292 = vpop.f32.mrf.mxu0
      %v1293 = vadd.f32 %v1244, %v1292
      %v1294 = vpop.f32.mrf.mxu0
      %v1295 = vadd.f32 %v1246, %v1294
      %1296 = vmatmul.bf16.gmra.mxu0 %v664
      %v1297 = vpop.f32.mrf.mxu0
      %v1298 = vadd.f32 %v1249, %v1297
      %v1299 = vpop.f32.mrf.mxu0
      %v1300 = vadd.f32 %v1251, %v1299
      %1301 = vmatmul.bf16.gmra.mxu0 %v669
      %v1302 = vpop.f32.mrf.mxu0
      %v1303 = vadd.f32 %v1254, %v1302
      %v1304 = vpop.f32.mrf.mxu0
      %v1305 = vadd.f32 %v1256, %v1304
      %1306 = vmatmul.bf16.gmra.mxu0 %v674
      %v1307 = vpop.f32.mrf.mxu0
      %v1308 = vadd.f32 %v1259, %v1307
      %v1309 = vpop.f32.mrf.mxu0
      %v1310 = vadd.f32 %v1261, %v1309
      %1311 = vdwg.mxu0
      %1312 = vmatpush.bf16.msra.mxu0 %v1034
      %1313 = vmatpush.bf16.msra.mxu0 %v1032
      %1314 = vmatpush.bf16.msra.mxu0 %v1030
      %1315 = vmatpush.bf16.msra.mxu0 %v1028
      %1316 = vmatpush.bf16.msra.mxu0 %v1026
      %1317 = vmatpush.bf16.msra.mxu0 %v1024
      %1318 = vmatpush.bf16.msra.mxu0 %v1022
      %1319 = vmatpush.bf16.msra.mxu0 %v1020
      %1320 = vmatmul.bf16.gmra.mxu0 %v640
      %v1321 = vpop.f32.mrf.mxu0
      %v1322 = vadd.f32 %v1273, %v1321
      %v1323 = vpop.f32.mrf.mxu0
      %v1324 = vadd.f32 %v1275, %v1323
      %1325 = vmatmul.bf16.gmra.mxu0 %v645
      %v1326 = vpop.f32.mrf.mxu0
      %v1327 = vadd.f32 %v1278, %v1326
      %v1328 = vpop.f32.mrf.mxu0
      %v1329 = vadd.f32 %v1280, %v1328
      %1330 = vmatmul.bf16.gmra.mxu0 %v650
      %v1331 = vpop.f32.mrf.mxu0
      %v1332 = vadd.f32 %v1283, %v1331
      %v1333 = vpop.f32.mrf.mxu0
      %v1334 = vadd.f32 %v1285, %v1333
      %1335 = vmatmul.bf16.gmra.mxu0 %v655
      %v1336 = vpop.f32.mrf.mxu0
      %v1337 = vadd.f32 %v1288, %v1336
      %v1338 = vpop.f32.mrf.mxu0
      %v1339 = vadd.f32 %v1290, %v1338
      %1340 = vmatmul.bf16.gmra.mxu0 %v660
      %v1341 = vpop.f32.mrf.mxu0
      %v1342 = vadd.f32 %v1293, %v1341
      %v1343 = vpop.f32.mrf.mxu0
      %v1344 = vadd.f32 %v1295, %v1343
      %1345 = vmatmul.bf16.gmra.mxu0 %v665
      %v1346 = vpop.f32.mrf.mxu0
      %v1347 = vadd.f32 %v1298, %v1346
      %v1348 = vpop.f32.mrf.mxu0
      %v1349 = vadd.f32 %v1300, %v1348
      %1350 = vmatmul.bf16.gmra.mxu0 %v670
      %v1351 = vpop.f32.mrf.mxu0
      %v1352 = vadd.f32 %v1303, %v1351
      %v1353 = vpop.f32.mrf.mxu0
      %v1354 = vadd.f32 %v1305, %v1353
      %1355 = vmatmul.bf16.gmra.mxu0 %v675
      %v1356 = vpop.f32.mrf.mxu0
      %v1357 = vadd.f32 %v1308, %v1356
      %v1358 = vpop.f32.mrf.mxu0
      %v1359 = vadd.f32 %v1310, %v1358
      %1360 = vdwg.mxu0
      %1361 = vmatpush.bf16.msra.mxu0 %v971
      %1362 = vmatpush.bf16.msra.mxu0 %v969
      %1363 = vmatpush.bf16.msra.mxu0 %v967
      %1364 = vmatpush.bf16.msra.mxu0 %v965
      %1365 = vmatpush.bf16.msra.mxu0 %v963
      %1366 = vmatpush.bf16.msra.mxu0 %v961
      %1367 = vmatpush.bf16.msra.mxu0 %v959
      %1368 = vmatpush.bf16.msra.mxu0 %v957
      %1369 = vmatmul.bf16.gmra.mxu0 %v636
      %v1370 = vpop.f32.mrf.mxu0
      %v1371 = vadd.f32 %v505, %v1370
      %v1372 = vpop.f32.mrf.mxu0
      %v1373 = vadd.f32 %v505, %v1372
      %1374 = vmatmul.bf16.gmra.mxu0 %v641
      %v1375 = vpop.f32.mrf.mxu0
      %v1376 = vadd.f32 %v505, %v1375
      %v1377 = vpop.f32.mrf.mxu0
      %v1378 = vadd.f32 %v505, %v1377
      %1379 = vmatmul.bf16.gmra.mxu0 %v646
      %v1380 = vpop.f32.mrf.mxu0
      %v1381 = vadd.f32 %v505, %v1380
      %v1382 = vpop.f32.mrf.mxu0
      %v1383 = vadd.f32 %v505, %v1382
      %1384 = vmatmul.bf16.gmra.mxu0 %v651
      %v1385 = vpop.f32.mrf.mxu0
      %v1386 = vadd.f32 %v505, %v1385
      %v1387 = vpop.f32.mrf.mxu0
      %v1388 = vadd.f32 %v505, %v1387
      %1389 = vmatmul.bf16.gmra.mxu0 %v656
      %v1390 = vpop.f32.mrf.mxu0
      %v1391 = vadd.f32 %v505, %v1390
      %v1392 = vpop.f32.mrf.mxu0
      %v1393 = vadd.f32 %v505, %v1392
      %1394 = vmatmul.bf16.gmra.mxu0 %v661
      %v1395 = vpop.f32.mrf.mxu0
      %v1396 = vadd.f32 %v505, %v1395
      %v1397 = vpop.f32.mrf.mxu0
      %v1398 = vadd.f32 %v505, %v1397
      %1399 = vmatmul.bf16.gmra.mxu0 %v666
      %v1400 = vpop.f32.mrf.mxu0
      %v1401 = vadd.f32 %v505, %v1400
      %v1402 = vpop.f32.mrf.mxu0
      %v1403 = vadd.f32 %v505, %v1402
      %1404 = vmatmul.bf16.gmra.mxu0 %v671
      %v1405 = vpop.f32.mrf.mxu0
      %v1406 = vadd.f32 %v505, %v1405
      %v1407 = vpop.f32.mrf.mxu0
      %v1408 = vadd.f32 %v505, %v1407
      %1409 = vdwg.mxu0
      %1410 = vmatpush.bf16.msra.mxu0 %v987
      %1411 = vmatpush.bf16.msra.mxu0 %v985
      %1412 = vmatpush.bf16.msra.mxu0 %v983
      %1413 = vmatpush.bf16.msra.mxu0 %v981
      %1414 = vmatpush.bf16.msra.mxu0 %v979
      %1415 = vmatpush.bf16.msra.mxu0 %v977
      %1416 = vmatpush.bf16.msra.mxu0 %v975
      %1417 = vmatpush.bf16.msra.mxu0 %v973
      %1418 = vmatmul.bf16.gmra.mxu0 %v637
      %v1419 = vpop.f32.mrf.mxu0
      %v1420 = vadd.f32 %v1371, %v1419
      %v1421 = vpop.f32.mrf.mxu0
      %v1422 = vadd.f32 %v1373, %v1421
      %1423 = vmatmul.bf16.gmra.mxu0 %v642
      %v1424 = vpop.f32.mrf.mxu0
      %v1425 = vadd.f32 %v1376, %v1424
      %v1426 = vpop.f32.mrf.mxu0
      %v1427 = vadd.f32 %v1378, %v1426
      %1428 = vmatmul.bf16.gmra.mxu0 %v647
      %v1429 = vpop.f32.mrf.mxu0
      %v1430 = vadd.f32 %v1381, %v1429
      %v1431 = vpop.f32.mrf.mxu0
      %v1432 = vadd.f32 %v1383, %v1431
      %1433 = vmatmul.bf16.gmra.mxu0 %v652
      %v1434 = vpop.f32.mrf.mxu0
      %v1435 = vadd.f32 %v1386, %v1434
      %v1436 = vpop.f32.mrf.mxu0
      %v1437 = vadd.f32 %v1388, %v1436
      %1438 = vmatmul.bf16.gmra.mxu0 %v657
      %v1439 = vpop.f32.mrf.mxu0
      %v1440 = vadd.f32 %v1391, %v1439
      %v1441 = vpop.f32.mrf.mxu0
      %v1442 = vadd.f32 %v1393, %v1441
      %1443 = vmatmul.bf16.gmra.mxu0 %v662
      %v1444 = vpop.f32.mrf.mxu0
      %v1445 = vadd.f32 %v1396, %v1444
      %v1446 = vpop.f32.mrf.mxu0
      %v1447 = vadd.f32 %v1398, %v1446
      %1448 = vmatmul.bf16.gmra.mxu0 %v667
      %v1449 = vpop.f32.mrf.mxu0
      %v1450 = vadd.f32 %v1401, %v1449
      %v1451 = vpop.f32.mrf.mxu0
      %v1452 = vadd.f32 %v1403, %v1451
      %1453 = vmatmul.bf16.gmra.mxu0 %v672
      %v1454 = vpop.f32.mrf.mxu0
      %v1455 = vadd.f32 %v1406, %v1454
      %v1456 = vpop.f32.mrf.mxu0
      %v1457 = vadd.f32 %v1408, %v1456
      %1458 = vdwg.mxu0
      %1459 = vmatpush.bf16.msra.mxu0 %v1003
      %1460 = vmatpush.bf16.msra.mxu0 %v1001
      %1461 = vmatpush.bf16.msra.mxu0 %v999
      %1462 = vmatpush.bf16.msra.mxu0 %v997
      %1463 = vmatpush.bf16.msra.mxu0 %v995
      %1464 = vmatpush.bf16.msra.mxu0 %v993
      %1465 = vmatpush.bf16.msra.mxu0 %v991
      %1466 = vmatpush.bf16.msra.mxu0 %v989
      %1467 = vmatmul.bf16.gmra.mxu0 %v638
      %v1468 = vpop.f32.mrf.mxu0
      %v1469 = vadd.f32 %v1420, %v1468
      %v1470 = vpop.f32.mrf.mxu0
      %v1471 = vadd.f32 %v1422, %v1470
      %1472 = vmatmul.bf16.gmra.mxu0 %v643
      %v1473 = vpop.f32.mrf.mxu0
      %v1474 = vadd.f32 %v1425, %v1473
      %v1475 = vpop.f32.mrf.mxu0
      %v1476 = vadd.f32 %v1427, %v1475
      %1477 = vmatmul.bf16.gmra.mxu0 %v648
      %v1478 = vpop.f32.mrf.mxu0
      %v1479 = vadd.f32 %v1430, %v1478
      %v1480 = vpop.f32.mrf.mxu0
      %v1481 = vadd.f32 %v1432, %v1480
      %1482 = vmatmul.bf16.gmra.mxu0 %v653
      %v1483 = vpop.f32.mrf.mxu0
      %v1484 = vadd.f32 %v1435, %v1483
      %v1485 = vpop.f32.mrf.mxu0
      %v1486 = vadd.f32 %v1437, %v1485
      %1487 = vmatmul.bf16.gmra.mxu0 %v658
      %v1488 = vpop.f32.mrf.mxu0
      %v1489 = vadd.f32 %v1440, %v1488
      %v1490 = vpop.f32.mrf.mxu0
      %v1491 = vadd.f32 %v1442, %v1490
      %1492 = vmatmul.bf16.gmra.mxu0 %v663
      %v1493 = vpop.f32.mrf.mxu0
      %v1494 = vadd.f32 %v1445, %v1493
      %v1495 = vpop.f32.mrf.mxu0
      %v1496 = vadd.f32 %v1447, %v1495
      %1497 = vmatmul.bf16.gmra.mxu0 %v668
      %v1498 = vpop.f32.mrf.mxu0
      %v1499 = vadd.f32 %v1450, %v1498
      %v1500 = vpop.f32.mrf.mxu0
      %v1501 = vadd.f32 %v1452, %v1500
      %1502 = vmatmul.bf16.gmra.mxu0 %v673
      %v1503 = vpop.f32.mrf.mxu0
      %v1504 = vadd.f32 %v1455, %v1503
      %v1505 = vpop.f32.mrf.mxu0
      %v1506 = vadd.f32 %v1457, %v1505
      %1507 = vdwg.mxu0
      %1508 = vmatpush.bf16.msra.mxu0 %v1019
      %1509 = vmatpush.bf16.msra.mxu0 %v1017
      %1510 = vmatpush.bf16.msra.mxu0 %v1015
      %1511 = vmatpush.bf16.msra.mxu0 %v1013
      %1512 = vmatpush.bf16.msra.mxu0 %v1011
      %1513 = vmatpush.bf16.msra.mxu0 %v1009
      %1514 = vmatpush.bf16.msra.mxu0 %v1007
      %1515 = vmatpush.bf16.msra.mxu0 %v1005
      %1516 = vmatmul.bf16.gmra.mxu0 %v639
      %v1517 = vpop.f32.mrf.mxu0
      %v1518 = vadd.f32 %v1469, %v1517
      %v1519 = vpop.f32.mrf.mxu0
      %v1520 = vadd.f32 %v1471, %v1519
      %1521 = vmatmul.bf16.gmra.mxu0 %v644
      %v1522 = vpop.f32.mrf.mxu0
      %v1523 = vadd.f32 %v1474, %v1522
      %v1524 = vpop.f32.mrf.mxu0
      %v1525 = vadd.f32 %v1476, %v1524
      %1526 = vmatmul.bf16.gmra.mxu0 %v649
      %v1527 = vpop.f32.mrf.mxu0
      %v1528 = vadd.f32 %v1479, %v1527
      %v1529 = vpop.f32.mrf.mxu0
      %v1530 = vadd.f32 %v1481, %v1529
      %1531 = vmatmul.bf16.gmra.mxu0 %v654
      %v1532 = vpop.f32.mrf.mxu0
      %v1533 = vadd.f32 %v1484, %v1532
      %v1534 = vpop.f32.mrf.mxu0
      %v1535 = vadd.f32 %v1486, %v1534
      %1536 = vmatmul.bf16.gmra.mxu0 %v659
      %v1537 = vpop.f32.mrf.mxu0
      %v1538 = vadd.f32 %v1489, %v1537
      %v1539 = vpop.f32.mrf.mxu0
      %v1540 = vadd.f32 %v1491, %v1539
      %1541 = vmatmul.bf16.gmra.mxu0 %v664
      %v1542 = vpop.f32.mrf.mxu0
      %v1543 = vadd.f32 %v1494, %v1542
      %v1544 = vpop.f32.mrf.mxu0
      %v1545 = vadd.f32 %v1496, %v1544
      %1546 = vmatmul.bf16.gmra.mxu0 %v669
      %v1547 = vpop.f32.mrf.mxu0
      %v1548 = vadd.f32 %v1499, %v1547
      %v1549 = vpop.f32.mrf.mxu0
      %v1550 = vadd.f32 %v1501, %v1549
      %1551 = vmatmul.bf16.gmra.mxu0 %v674
      %v1552 = vpop.f32.mrf.mxu0
      %v1553 = vadd.f32 %v1504, %v1552
      %v1554 = vpop.f32.mrf.mxu0
      %v1555 = vadd.f32 %v1506, %v1554
      %1556 = vdwg.mxu0
      %1557 = vmatpush.bf16.msra.mxu0 %v1035
      %1558 = vmatpush.bf16.msra.mxu0 %v1033
      %1559 = vmatpush.bf16.msra.mxu0 %v1031
      %1560 = vmatpush.bf16.msra.mxu0 %v1029
      %1561 = vmatpush.bf16.msra.mxu0 %v1027
      %1562 = vmatpush.bf16.msra.mxu0 %v1025
      %1563 = vmatpush.bf16.msra.mxu0 %v1023
      %1564 = vmatpush.bf16.msra.mxu0 %v1021
      %1565 = vmatmul.bf16.gmra.mxu0 %v640
      %v1566 = vpop.f32.mrf.mxu0
      %v1567 = vadd.f32 %v1518, %v1566
      %v1568 = vpop.f32.mrf.mxu0
      %v1569 = vadd.f32 %v1520, %v1568
      %1570 = vmatmul.bf16.gmra.mxu0 %v645
      %v1571 = vpop.f32.mrf.mxu0
      %v1572 = vadd.f32 %v1523, %v1571
      %v1573 = vpop.f32.mrf.mxu0
      %v1574 = vadd.f32 %v1525, %v1573
      %1575 = vmatmul.bf16.gmra.mxu0 %v650
      %v1576 = vpop.f32.mrf.mxu0
      %v1577 = vadd.f32 %v1528, %v1576
      %v1578 = vpop.f32.mrf.mxu0
      %v1579 = vadd.f32 %v1530, %v1578
      %1580 = vmatmul.bf16.gmra.mxu0 %v655
      %v1581 = vpop.f32.mrf.mxu0
      %v1582 = vadd.f32 %v1533, %v1581
      %v1583 = vpop.f32.mrf.mxu0
      %v1584 = vadd.f32 %v1535, %v1583
      %1585 = vmatmul.bf16.gmra.mxu0 %v660
      %v1586 = vpop.f32.mrf.mxu0
      %v1587 = vadd.f32 %v1538, %v1586
      %v1588 = vpop.f32.mrf.mxu0
      %v1589 = vadd.f32 %v1540, %v1588
      %1590 = vmatmul.bf16.gmra.mxu0 %v665
      %v1591 = vpop.f32.mrf.mxu0
      %v1592 = vadd.f32 %v1543, %v1591
      %v1593 = vpop.f32.mrf.mxu0
      %v1594 = vadd.f32 %v1545, %v1593
      %1595 = vmatmul.bf16.gmra.mxu0 %v670
      %v1596 = vpop.f32.mrf.mxu0
      %v1597 = vadd.f32 %v1548, %v1596
      %v1598 = vpop.f32.mrf.mxu0
      %v1599 = vadd.f32 %v1550, %v1598
      %1600 = vmatmul.bf16.gmra.mxu0 %v675
      %v1601 = vpop.f32.mrf.mxu0
      %v1602 = vadd.f32 %v1553, %v1601
      %v1603 = vpop.f32.mrf.mxu0
      %v1604 = vadd.f32 %v1555, %v1603
      %1605 = vdwg.mxu0
      %v1606 = vmax.f32 %v1322, 0.0
      %v1607 = vmax.f32 %v1567, 0.0
      %v1608 = vmax.f32 %v1324, 0.0
      %v1609 = vmax.f32 %v1569, 0.0
      %v1610 = vmax.f32 %v1327, 0.0
      %v1611 = vmax.f32 %v1572, 0.0
      %v1612 = vmax.f32 %v1329, 0.0
      %v1613 = vmax.f32 %v1574, 0.0
      %v1614 = vmax.f32 %v1332, 0.0
      %v1615 = vmax.f32 %v1577, 0.0
      %v1616 = vmax.f32 %v1334, 0.0
      %v1617 = vmax.f32 %v1579, 0.0
      %v1618 = vmax.f32 %v1337, 0.0
      %v1619 = vmax.f32 %v1582, 0.0
      %v1620 = vmax.f32 %v1339, 0.0
      %v1621 = vmax.f32 %v1584, 0.0
      %v1622 = vmax.f32 %v1342, 0.0
      %v1623 = vmax.f32 %v1587, 0.0
      %v1624 = vmax.f32 %v1344, 0.0
      %v1625 = vmax.f32 %v1589, 0.0
      %v1626 = vmax.f32 %v1347, 0.0
      %v1627 = vmax.f32 %v1592, 0.0
      %v1628 = vmax.f32 %v1349, 0.0
      %v1629 = vmax.f32 %v1594, 0.0
      %v1630 = vmax.f32 %v1352, 0.0
      %v1631 = vmax.f32 %v1597, 0.0
      %v1632 = vmax.f32 %v1354, 0.0
      %v1633 = vmax.f32 %v1599, 0.0
      %v1634 = vmax.f32 %v1357, 0.0
      %v1635 = vmax.f32 %v1602, 0.0
      %v1636 = vmax.f32 %v1359, 0.0
      %v1637 = vmax.f32 %v1604, 0.0
      %v1638 = vpack.c.bf16 %v1608, %v1606
      %v1639 = vpack.c.bf16 %v1609, %v1607
      %v1640 = vpack.c.bf16 %v1612, %v1610
      %v1641 = vpack.c.bf16 %v1613, %v1611
      %v1642 = vpack.c.bf16 %v1616, %v1614
      %v1643 = vpack.c.bf16 %v1617, %v1615
      %v1644 = vpack.c.bf16 %v1620, %v1618
      %v1645 = vpack.c.bf16 %v1621, %v1619
      %v1646 = vpack.c.bf16 %v1624, %v1622
      %v1647 = vpack.c.bf16 %v1625, %v1623
      %v1648 = vpack.c.bf16 %v1628, %v1626
      %v1649 = vpack.c.bf16 %v1629, %v1627
      %v1650 = vpack.c.bf16 %v1632, %v1630
      %v1651 = vpack.c.bf16 %v1633, %v1631
      %v1652 = vpack.c.bf16 %v1636, %v1634
      %v1653 = vpack.c.bf16 %v1637, %v1635
      %v1654 = vld [vmem:[%s4] sm:$0xff]
      %v1655 = vld [vmem:[%s4 + $0x8] sm:$0xff]
      %v1656 = vld [vmem:[%s4 + $0x10] sm:$0xff]
      %v1657 = vld [vmem:[%s4 + $0x18] sm:$0xff]
      %v1658 = vld [vmem:[%s4 + $0x20] sm:$0xff]
      %v1659 = vld [vmem:[%s4 + $0x28] sm:$0xff]
      %v1660 = vld [vmem:[%s4 + $0x30] sm:$0xff]
      %v1661 = vld [vmem:[%s4 + $0x38] sm:$0xff]
      %v1662 = vld [vmem:[%s4 + $0x40] sm:$0xff]
      %v1663 = vld [vmem:[%s4 + $0x48] sm:$0xff]
      %v1664 = vld [vmem:[%s4 + $0x50] sm:$0xff]
      %v1665 = vld [vmem:[%s4 + $0x58] sm:$0xff]
      %v1666 = vld [vmem:[%s4 + $0x60] sm:$0xff]
      %v1667 = vld [vmem:[%s4 + $0x68] sm:$0xff]
      %v1668 = vld [vmem:[%s4 + $0x70] sm:$0xff]
      %v1669 = vld [vmem:[%s4 + $0x78] sm:$0xff]
      %v1670 = vld [vmem:[%s4 + $0x80] sm:$0xff]
      %v1671 = vld [vmem:[%s4 + $0x88] sm:$0xff]
      %v1672 = vld [vmem:[%s4 + $0x90] sm:$0xff]
      %v1673 = vld [vmem:[%s4 + $0x98] sm:$0xff]
      %v1674 = vld [vmem:[%s4 + $0xa0] sm:$0xff]
      %v1675 = vld [vmem:[%s4 + $0xa8] sm:$0xff]
      %v1676 = vld [vmem:[%s4 + $0xb0] sm:$0xff]
      %v1677 = vld [vmem:[%s4 + $0xb8] sm:$0xff]
      %v1678 = vld [vmem:[%s4 + $0xc0] sm:$0xff]
      %v1679 = vld [vmem:[%s4 + $0xc8] sm:$0xff]
      %v1680 = vld [vmem:[%s4 + $0xd0] sm:$0xff]
      %v1681 = vld [vmem:[%s4 + $0xd8] sm:$0xff]
      %v1682 = vld [vmem:[%s4 + $0xe0] sm:$0xff]
      %v1683 = vld [vmem:[%s4 + $0xe8] sm:$0xff]
      %v1684 = vld [vmem:[%s4 + $0xf0] sm:$0xff]
      %v1685 = vld [vmem:[%s4 + $0xf8] sm:$0xff]
      %v1686 = vld [vmem:[%s5] sm:$0x3]
      %v1688 = vperm.slane %v1686, 0
      %v1689 = vperm.slane %v1686, 1
      %v1724 = vunpack.c.l.b16 %v1654
      %v1725 = vunpack.c.h.b16 %v1654
      %v1726 = vunpack.c.l.b16 %v1655
      %v1727 = vunpack.c.h.b16 %v1655
      %v1728 = vunpack.c.l.b16 %v1656
      %v1729 = vunpack.c.h.b16 %v1656
      %v1730 = vunpack.c.l.b16 %v1657
      %v1731 = vunpack.c.h.b16 %v1657
      %v1732 = vunpack.c.l.b16 %v1658
      %v1733 = vunpack.c.h.b16 %v1658
      %v1734 = vunpack.c.l.b16 %v1659
      %v1735 = vunpack.c.h.b16 %v1659
      %v1736 = vunpack.c.l.b16 %v1660
      %v1737 = vunpack.c.h.b16 %v1660
      %v1738 = vunpack.c.l.b16 %v1661
      %v1739 = vunpack.c.h.b16 %v1661
      %v1740 = vunpack.c.l.b16 %v1662
      %v1741 = vunpack.c.h.b16 %v1662
      %v1742 = vunpack.c.l.b16 %v1663
      %v1743 = vunpack.c.h.b16 %v1663
      %v1744 = vunpack.c.l.b16 %v1664
      %v1745 = vunpack.c.h.b16 %v1664
      %v1746 = vunpack.c.l.b16 %v1665
      %v1747 = vunpack.c.h.b16 %v1665
      %v1748 = vunpack.c.l.b16 %v1666
      %v1749 = vunpack.c.h.b16 %v1666
      %v1750 = vunpack.c.l.b16 %v1667
      %v1751 = vunpack.c.h.b16 %v1667
      %v1752 = vunpack.c.l.b16 %v1668
      %v1753 = vunpack.c.h.b16 %v1668
      %v1754 = vunpack.c.l.b16 %v1669
      %v1755 = vunpack.c.h.b16 %v1669
      %v1756 = vunpack.c.l.b16 %v1670
      %v1757 = vunpack.c.h.b16 %v1670
      %v1758 = vunpack.c.l.b16 %v1671
      %v1759 = vunpack.c.h.b16 %v1671
      %v1760 = vunpack.c.l.b16 %v1672
      %v1761 = vunpack.c.h.b16 %v1672
      %v1762 = vunpack.c.l.b16 %v1673
      %v1763 = vunpack.c.h.b16 %v1673
      %v1764 = vunpack.c.l.b16 %v1674
      %v1765 = vunpack.c.h.b16 %v1674
      %v1766 = vunpack.c.l.b16 %v1675
      %v1767 = vunpack.c.h.b16 %v1675
      %v1768 = vunpack.c.l.b16 %v1676
      %v1769 = vunpack.c.h.b16 %v1676
      %v1770 = vunpack.c.l.b16 %v1677
      %v1771 = vunpack.c.h.b16 %v1677
      %v1772 = vunpack.c.l.b16 %v1678
      %v1773 = vunpack.c.h.b16 %v1678
      %v1774 = vunpack.c.l.b16 %v1679
      %v1775 = vunpack.c.h.b16 %v1679
      %v1776 = vunpack.c.l.b16 %v1680
      %v1777 = vunpack.c.h.b16 %v1680
      %v1778 = vunpack.c.l.b16 %v1681
      %v1779 = vunpack.c.h.b16 %v1681
      %v1780 = vunpack.c.l.b16 %v1682
      %v1781 = vunpack.c.h.b16 %v1682
      %v1782 = vunpack.c.l.b16 %v1683
      %v1783 = vunpack.c.h.b16 %v1683
      %v1784 = vunpack.c.l.b16 %v1684
      %v1785 = vunpack.c.h.b16 %v1684
      %v1786 = vunpack.c.l.b16 %v1685
      %v1787 = vunpack.c.h.b16 %v1685
      %v1788 = vpack.c.b16 %v1726, %v1724
      %v1789 = vpack.c.b16 %v1727, %v1725
      %v1790 = vpack.c.b16 %v1730, %v1728
      %v1791 = vpack.c.b16 %v1731, %v1729
      %v1792 = vpack.c.b16 %v1734, %v1732
      %v1793 = vpack.c.b16 %v1735, %v1733
      %v1794 = vpack.c.b16 %v1738, %v1736
      %v1795 = vpack.c.b16 %v1739, %v1737
      %v1796 = vpack.c.b16 %v1742, %v1740
      %v1797 = vpack.c.b16 %v1743, %v1741
      %v1798 = vpack.c.b16 %v1746, %v1744
      %v1799 = vpack.c.b16 %v1747, %v1745
      %v1800 = vpack.c.b16 %v1750, %v1748
      %v1801 = vpack.c.b16 %v1751, %v1749
      %v1802 = vpack.c.b16 %v1754, %v1752
      %v1803 = vpack.c.b16 %v1755, %v1753
      %v1804 = vpack.c.b16 %v1758, %v1756
      %v1805 = vpack.c.b16 %v1759, %v1757
      %v1806 = vpack.c.b16 %v1762, %v1760
      %v1807 = vpack.c.b16 %v1763, %v1761
      %v1808 = vpack.c.b16 %v1766, %v1764
      %v1809 = vpack.c.b16 %v1767, %v1765
      %v1810 = vpack.c.b16 %v1770, %v1768
      %v1811 = vpack.c.b16 %v1771, %v1769
      %v1812 = vpack.c.b16 %v1774, %v1772
      %v1813 = vpack.c.b16 %v1775, %v1773
      %v1814 = vpack.c.b16 %v1778, %v1776
      %v1815 = vpack.c.b16 %v1779, %v1777
      %v1816 = vpack.c.b16 %v1782, %v1780
      %v1817 = vpack.c.b16 %v1783, %v1781
      %v1818 = vpack.c.b16 %v1786, %v1784
      %v1819 = vpack.c.b16 %v1787, %v1785
      %1852 = vmatpush.bf16.msra.mxu0 %v1802
      %1853 = vmatpush.bf16.msra.mxu0 %v1800
      %1854 = vmatpush.bf16.msra.mxu0 %v1798
      %1855 = vmatpush.bf16.msra.mxu0 %v1796
      %1856 = vmatpush.bf16.msra.mxu0 %v1794
      %1857 = vmatpush.bf16.msra.mxu0 %v1792
      %1858 = vmatpush.bf16.msra.mxu0 %v1790
      %1859 = vmatpush.bf16.msra.mxu0 %v1788
      %1860 = vmatmul.bf16.gmra.mxu0 %v1638
      %v1861 = vpop.f32.mrf.mxu0
      %v1862 = vadd.f32 %v1688, %v1861
      %v1863 = vpop.f32.mrf.mxu0
      %v1864 = vadd.f32 %v1688, %v1863
      %1865 = vmatmul.bf16.gmra.mxu0 %v1640
      %v1866 = vpop.f32.mrf.mxu0
      %v1867 = vadd.f32 %v1688, %v1866
      %v1868 = vpop.f32.mrf.mxu0
      %v1869 = vadd.f32 %v1688, %v1868
      %1870 = vmatmul.bf16.gmra.mxu0 %v1642
      %v1871 = vpop.f32.mrf.mxu0
      %v1872 = vadd.f32 %v1688, %v1871
      %v1873 = vpop.f32.mrf.mxu0
      %v1874 = vadd.f32 %v1688, %v1873
      %1875 = vmatmul.bf16.gmra.mxu0 %v1644
      %v1876 = vpop.f32.mrf.mxu0
      %v1877 = vadd.f32 %v1688, %v1876
      %v1878 = vpop.f32.mrf.mxu0
      %v1879 = vadd.f32 %v1688, %v1878
      %1880 = vmatmul.bf16.gmra.mxu0 %v1646
      %v1881 = vpop.f32.mrf.mxu0
      %v1882 = vadd.f32 %v1688, %v1881
      %v1883 = vpop.f32.mrf.mxu0
      %v1884 = vadd.f32 %v1688, %v1883
      %1885 = vmatmul.bf16.gmra.mxu0 %v1648
      %v1886 = vpop.f32.mrf.mxu0
      %v1887 = vadd.f32 %v1688, %v1886
      %v1888 = vpop.f32.mrf.mxu0
      %v1889 = vadd.f32 %v1688, %v1888
      %1890 = vmatmul.bf16.gmra.mxu0 %v1650
      %v1891 = vpop.f32.mrf.mxu0
      %v1892 = vadd.f32 %v1688, %v1891
      %v1893 = vpop.f32.mrf.mxu0
      %v1894 = vadd.f32 %v1688, %v1893
      %1895 = vmatmul.bf16.gmra.mxu0 %v1652
      %v1896 = vpop.f32.mrf.mxu0
      %v1897 = vadd.f32 %v1688, %v1896
      %v1898 = vpop.f32.mrf.mxu0
      %v1899 = vadd.f32 %v1688, %v1898
      %1900 = vdwg.mxu0
      %1901 = vmatpush.bf16.msra.mxu0 %v1818
      %1902 = vmatpush.bf16.msra.mxu0 %v1816
      %1903 = vmatpush.bf16.msra.mxu0 %v1814
      %1904 = vmatpush.bf16.msra.mxu0 %v1812
      %1905 = vmatpush.bf16.msra.mxu0 %v1810
      %1906 = vmatpush.bf16.msra.mxu0 %v1808
      %1907 = vmatpush.bf16.msra.mxu0 %v1806
      %1908 = vmatpush.bf16.msra.mxu0 %v1804
      %1909 = vmatmul.bf16.gmra.mxu0 %v1639
      %v1910 = vpop.f32.mrf.mxu0
      %v1911 = vadd.f32 %v1862, %v1910
      %v1912 = vpop.f32.mrf.mxu0
      %v1913 = vadd.f32 %v1864, %v1912
      %1914 = vmatmul.bf16.gmra.mxu0 %v1641
      %v1915 = vpop.f32.mrf.mxu0
      %v1916 = vadd.f32 %v1867, %v1915
      %v1917 = vpop.f32.mrf.mxu0
      %v1918 = vadd.f32 %v1869, %v1917
      %1919 = vmatmul.bf16.gmra.mxu0 %v1643
      %v1920 = vpop.f32.mrf.mxu0
      %v1921 = vadd.f32 %v1872, %v1920
      %v1922 = vpop.f32.mrf.mxu0
      %v1923 = vadd.f32 %v1874, %v1922
      %1924 = vmatmul.bf16.gmra.mxu0 %v1645
      %v1925 = vpop.f32.mrf.mxu0
      %v1926 = vadd.f32 %v1877, %v1925
      %v1927 = vpop.f32.mrf.mxu0
      %v1928 = vadd.f32 %v1879, %v1927
      %1929 = vmatmul.bf16.gmra.mxu0 %v1647
      %v1930 = vpop.f32.mrf.mxu0
      %v1931 = vadd.f32 %v1882, %v1930
      %v1932 = vpop.f32.mrf.mxu0
      %v1933 = vadd.f32 %v1884, %v1932
      %1934 = vmatmul.bf16.gmra.mxu0 %v1649
      %v1935 = vpop.f32.mrf.mxu0
      %v1936 = vadd.f32 %v1887, %v1935
      %v1937 = vpop.f32.mrf.mxu0
      %v1938 = vadd.f32 %v1889, %v1937
      %1939 = vmatmul.bf16.gmra.mxu0 %v1651
      %v1940 = vpop.f32.mrf.mxu0
      %v1941 = vadd.f32 %v1892, %v1940
      %v1942 = vpop.f32.mrf.mxu0
      %v1943 = vadd.f32 %v1894, %v1942
      %1944 = vmatmul.bf16.gmra.mxu0 %v1653
      %v1945 = vpop.f32.mrf.mxu0
      %v1946 = vadd.f32 %v1897, %v1945
      %v1947 = vpop.f32.mrf.mxu0
      %v1948 = vadd.f32 %v1899, %v1947
      %1949 = vdwg.mxu0
      %1950 = vmatpush.bf16.msra.mxu0 %v1803
      %1951 = vmatpush.bf16.msra.mxu0 %v1801
      %1952 = vmatpush.bf16.msra.mxu0 %v1799
      %1953 = vmatpush.bf16.msra.mxu0 %v1797
      %1954 = vmatpush.bf16.msra.mxu0 %v1795
      %1955 = vmatpush.bf16.msra.mxu0 %v1793
      %1956 = vmatpush.bf16.msra.mxu0 %v1791
      %1957 = vmatpush.bf16.msra.mxu0 %v1789
      %1958 = vmatmul.bf16.gmra.mxu0 %v1638
      %v1959 = vpop.f32.mrf.mxu0
      %v1960 = vadd.f32 %v1689, %v1959
      %v1961 = vpop.f32.mrf.mxu0
      %v1962 = vadd.f32 %v1689, %v1961
      %1963 = vmatmul.bf16.gmra.mxu0 %v1640
      %v1964 = vpop.f32.mrf.mxu0
      %v1965 = vadd.f32 %v1689, %v1964
      %v1966 = vpop.f32.mrf.mxu0
      %v1967 = vadd.f32 %v1689, %v1966
      %1968 = vmatmul.bf16.gmra.mxu0 %v1642
      %v1969 = vpop.f32.mrf.mxu0
      %v1970 = vadd.f32 %v1689, %v1969
      %v1971 = vpop.f32.mrf.mxu0
      %v1972 = vadd.f32 %v1689, %v1971
      %1973 = vmatmul.bf16.gmra.mxu0 %v1644
      %v1974 = vpop.f32.mrf.mxu0
      %v1975 = vadd.f32 %v1689, %v1974
      %v1976 = vpop.f32.mrf.mxu0
      %v1977 = vadd.f32 %v1689, %v1976
      %1978 = vmatmul.bf16.gmra.mxu0 %v1646
      %v1979 = vpop.f32.mrf.mxu0
      %v1980 = vadd.f32 %v1689, %v1979
      %v1981 = vpop.f32.mrf.mxu0
      %v1982 = vadd.f32 %v1689, %v1981
      %1983 = vmatmul.bf16.gmra.mxu0 %v1648
      %v1984 = vpop.f32.mrf.mxu0
      %v1985 = vadd.f32 %v1689, %v1984
      %v1986 = vpop.f32.mrf.mxu0
      %v1987 = vadd.f32 %v1689, %v1986
      %1988 = vmatmul.bf16.gmra.mxu0 %v1650
      %v1989 = vpop.f32.mrf.mxu0
      %v1990 = vadd.f32 %v1689, %v1989
      %v1991 = vpop.f32.mrf.mxu0
      %v1992 = vadd.f32 %v1689, %v1991
      %1993 = vmatmul.bf16.gmra.mxu0 %v1652
      %v1994 = vpop.f32.mrf.mxu0
      %v1995 = vadd.f32 %v1689, %v1994
      %v1996 = vpop.f32.mrf.mxu0
      %v1997 = vadd.f32 %v1689, %v1996
      %1998 = vdwg.mxu0
      %1999 = vmatpush.bf16.msra.mxu0 %v1819
      %2000 = vmatpush.bf16.msra.mxu0 %v1817
      %2001 = vmatpush.bf16.msra.mxu0 %v1815
      %2002 = vmatpush.bf16.msra.mxu0 %v1813
      %2003 = vmatpush.bf16.msra.mxu0 %v1811
      %2004 = vmatpush.bf16.msra.mxu0 %v1809
      %2005 = vmatpush.bf16.msra.mxu0 %v1807
      %2006 = vmatpush.bf16.msra.mxu0 %v1805
      %2007 = vmatmul.bf16.gmra.mxu0 %v1639
      %v2008 = vpop.f32.mrf.mxu0
      %v2009 = vadd.f32 %v1960, %v2008
      %v2010 = vpop.f32.mrf.mxu0
      %v2011 = vadd.f32 %v1962, %v2010
      %2012 = vmatmul.bf16.gmra.mxu0 %v1641
      %v2013 = vpop.f32.mrf.mxu0
      %v2014 = vadd.f32 %v1965, %v2013
      %v2015 = vpop.f32.mrf.mxu0
      %v2016 = vadd.f32 %v1967, %v2015
      %2017 = vmatmul.bf16.gmra.mxu0 %v1643
      %v2018 = vpop.f32.mrf.mxu0
      %v2019 = vadd.f32 %v1970, %v2018
      %v2020 = vpop.f32.mrf.mxu0
      %v2021 = vadd.f32 %v1972, %v2020
      %2022 = vmatmul.bf16.gmra.mxu0 %v1645
      %v2023 = vpop.f32.mrf.mxu0
      %v2024 = vadd.f32 %v1975, %v2023
      %v2025 = vpop.f32.mrf.mxu0
      %v2026 = vadd.f32 %v1977, %v2025
      %2027 = vmatmul.bf16.gmra.mxu0 %v1647
      %v2028 = vpop.f32.mrf.mxu0
      %v2029 = vadd.f32 %v1980, %v2028
      %v2030 = vpop.f32.mrf.mxu0
      %v2031 = vadd.f32 %v1982, %v2030
      %2032 = vmatmul.bf16.gmra.mxu0 %v1649
      %v2033 = vpop.f32.mrf.mxu0
      %v2034 = vadd.f32 %v1985, %v2033
      %v2035 = vpop.f32.mrf.mxu0
      %v2036 = vadd.f32 %v1987, %v2035
      %2037 = vmatmul.bf16.gmra.mxu0 %v1651
      %v2038 = vpop.f32.mrf.mxu0
      %v2039 = vadd.f32 %v1990, %v2038
      %v2040 = vpop.f32.mrf.mxu0
      %v2041 = vadd.f32 %v1992, %v2040
      %2042 = vmatmul.bf16.gmra.mxu0 %v1653
      %v2043 = vpop.f32.mrf.mxu0
      %v2044 = vadd.f32 %v1995, %v2043
      %v2045 = vpop.f32.mrf.mxu0
      %v2046 = vadd.f32 %v1997, %v2045
      %2047 = vdwg.mxu0
      %v2048 = vmax.f32 %v1911, 0.0
      %v2049 = vmax.f32 %v2009, 0.0
      %v2050 = vmax.f32 %v1913, 0.0
      %v2051 = vmax.f32 %v2011, 0.0
      %v2052 = vmax.f32 %v1916, 0.0
      %v2053 = vmax.f32 %v2014, 0.0
      %v2054 = vmax.f32 %v1918, 0.0
      %v2055 = vmax.f32 %v2016, 0.0
      %v2056 = vmax.f32 %v1921, 0.0
      %v2057 = vmax.f32 %v2019, 0.0
      %v2058 = vmax.f32 %v1923, 0.0
      %v2059 = vmax.f32 %v2021, 0.0
      %v2060 = vmax.f32 %v1926, 0.0
      %v2061 = vmax.f32 %v2024, 0.0
      %v2062 = vmax.f32 %v1928, 0.0
      %v2063 = vmax.f32 %v2026, 0.0
      %v2064 = vmax.f32 %v1931, 0.0
      %v2065 = vmax.f32 %v2029, 0.0
      %v2066 = vmax.f32 %v1933, 0.0
      %v2067 = vmax.f32 %v2031, 0.0
      %v2068 = vmax.f32 %v1936, 0.0
      %v2069 = vmax.f32 %v2034, 0.0
      %v2070 = vmax.f32 %v1938, 0.0
      %v2071 = vmax.f32 %v2036, 0.0
      %v2072 = vmax.f32 %v1941, 0.0
      %v2073 = vmax.f32 %v2039, 0.0
      %v2074 = vmax.f32 %v1943, 0.0
      %v2075 = vmax.f32 %v2041, 0.0
      %v2076 = vmax.f32 %v1946, 0.0
      %v2077 = vmax.f32 %v2044, 0.0
      %v2078 = vmax.f32 %v1948, 0.0
      %v2079 = vmax.f32 %v2046, 0.0
      %v2080 = vpack.c.bf16 %v2050, %v2048
      %v2081 = vpack.c.bf16 %v2051, %v2049
      %v2082 = vpack.c.bf16 %v2054, %v2052
      %v2083 = vpack.c.bf16 %v2055, %v2053
      %v2084 = vpack.c.bf16 %v2058, %v2056
      %v2085 = vpack.c.bf16 %v2059, %v2057
      %v2086 = vpack.c.bf16 %v2062, %v2060
      %v2087 = vpack.c.bf16 %v2063, %v2061
      %v2088 = vpack.c.bf16 %v2066, %v2064
      %v2089 = vpack.c.bf16 %v2067, %v2065
      %v2090 = vpack.c.bf16 %v2070, %v2068
      %v2091 = vpack.c.bf16 %v2071, %v2069
      %v2092 = vpack.c.bf16 %v2074, %v2072
      %v2093 = vpack.c.bf16 %v2075, %v2073
      %v2094 = vpack.c.bf16 %v2078, %v2076
      %v2095 = vpack.c.bf16 %v2079, %v2077
      %v2096 = vld [vmem:[%s6] sm:$0xf]
      %v2097 = vld [vmem:[%s6 + $0x4] sm:$0xf]
      %v2098 = vld [vmem:[%s6 + $0x8] sm:$0xf]
      %v2099 = vld [vmem:[%s6 + $0xc] sm:$0xf]
      %v2100 = vld [vmem:[%s6 + $0x10] sm:$0xf]
      %v2101 = vld [vmem:[%s6 + $0x14] sm:$0xf]
      %v2102 = vld [vmem:[%s6 + $0x18] sm:$0xf]
      %v2103 = vld [vmem:[%s6 + $0x1c] sm:$0xf]
      %v2104 = vld [vmem:[%s6 + $0x20] sm:$0xf]
      %v2105 = vld [vmem:[%s6 + $0x24] sm:$0xf]
      %v2106 = vld [vmem:[%s6 + $0x28] sm:$0xf]
      %v2107 = vld [vmem:[%s6 + $0x2c] sm:$0xf]
      %v2108 = vld [vmem:[%s6 + $0x30] sm:$0xf]
      %v2109 = vld [vmem:[%s6 + $0x34] sm:$0xf]
      %v2110 = vld [vmem:[%s6 + $0x38] sm:$0xf]
      %v2111 = vld [vmem:[%s6 + $0x3c] sm:$0xf]
      %v2112 = vld [vmem:[%s6 + $0x40] sm:$0xf]
      %v2113 = vld [vmem:[%s6 + $0x44] sm:$0xf]
      %v2114 = vld [vmem:[%s6 + $0x48] sm:$0xf]
      %v2115 = vld [vmem:[%s6 + $0x4c] sm:$0xf]
      %v2116 = vld [vmem:[%s6 + $0x50] sm:$0xf]
      %v2117 = vld [vmem:[%s6 + $0x54] sm:$0xf]
      %v2118 = vld [vmem:[%s6 + $0x58] sm:$0xf]
      %v2119 = vld [vmem:[%s6 + $0x5c] sm:$0xf]
      %v2120 = vld [vmem:[%s6 + $0x60] sm:$0xf]
      %v2121 = vld [vmem:[%s6 + $0x64] sm:$0xf]
      %v2122 = vld [vmem:[%s6 + $0x68] sm:$0xf]
      %v2123 = vld [vmem:[%s6 + $0x6c] sm:$0xf]
      %v2124 = vld [vmem:[%s6 + $0x70] sm:$0xf]
      %v2125 = vld [vmem:[%s6 + $0x74] sm:$0xf]
      %v2126 = vld [vmem:[%s6 + $0x78] sm:$0xf]
      %v2127 = vld [vmem:[%s6 + $0x7c] sm:$0xf]
      %v2128 = vld [vmem:[%s7] sm:$0x1]
      %v2130 = vperm.slane %v2128, 0
      %v2164 = vunpack.c.l.b16 %v2096
      %v2165 = vunpack.c.l.b16 %v2097
      %v2166 = vunpack.c.l.b16 %v2098
      %v2167 = vunpack.c.l.b16 %v2099
      %v2168 = vunpack.c.l.b16 %v2100
      %v2169 = vunpack.c.l.b16 %v2101
      %v2170 = vunpack.c.l.b16 %v2102
      %v2171 = vunpack.c.l.b16 %v2103
      %v2172 = vunpack.c.l.b16 %v2104
      %v2173 = vunpack.c.l.b16 %v2105
      %v2174 = vunpack.c.l.b16 %v2106
      %v2175 = vunpack.c.l.b16 %v2107
      %v2176 = vunpack.c.l.b16 %v2108
      %v2177 = vunpack.c.l.b16 %v2109
      %v2178 = vunpack.c.l.b16 %v2110
      %v2179 = vunpack.c.l.b16 %v2111
      %v2180 = vunpack.c.l.b16 %v2112
      %v2181 = vunpack.c.l.b16 %v2113
      %v2182 = vunpack.c.l.b16 %v2114
      %v2183 = vunpack.c.l.b16 %v2115
      %v2184 = vunpack.c.l.b16 %v2116
      %v2185 = vunpack.c.l.b16 %v2117
      %v2186 = vunpack.c.l.b16 %v2118
      %v2187 = vunpack.c.l.b16 %v2119
      %v2188 = vunpack.c.l.b16 %v2120
      %v2189 = vunpack.c.l.b16 %v2121
      %v2190 = vunpack.c.l.b16 %v2122
      %v2191 = vunpack.c.l.b16 %v2123
      %v2192 = vunpack.c.l.b16 %v2124
      %v2193 = vunpack.c.l.b16 %v2125
      %v2194 = vunpack.c.l.b16 %v2126
      %v2195 = vunpack.c.l.b16 %v2127
      %v2196 = vpack.c.b16 %v2165, %v2164
      %v2197 = vpack.c.b16 %v2167, %v2166
      %v2198 = vpack.c.b16 %v2169, %v2168
      %v2199 = vpack.c.b16 %v2171, %v2170
      %v2200 = vpack.c.b16 %v2173, %v2172
      %v2201 = vpack.c.b16 %v2175, %v2174
      %v2202 = vpack.c.b16 %v2177, %v2176
      %v2203 = vpack.c.b16 %v2179, %v2178
      %v2204 = vpack.c.b16 %v2181, %v2180
      %v2205 = vpack.c.b16 %v2183, %v2182
      %v2206 = vpack.c.b16 %v2185, %v2184
      %v2207 = vpack.c.b16 %v2187, %v2186
      %v2208 = vpack.c.b16 %v2189, %v2188
      %v2209 = vpack.c.b16 %v2191, %v2190
      %v2210 = vpack.c.b16 %v2193, %v2192
      %v2211 = vpack.c.b16 %v2195, %v2194
      %2228 = vmatpush.bf16.msra.mxu0 %v2203
      %2229 = vmatpush.bf16.msra.mxu0 %v2202
      %2230 = vmatpush.bf16.msra.mxu0 %v2201
      %2231 = vmatpush.bf16.msra.mxu0 %v2200
      %2232 = vmatpush.bf16.msra.mxu0 %v2199
      %2233 = vmatpush.bf16.msra.mxu0 %v2198
      %2234 = vmatpush.bf16.msra.mxu0 %v2197
      %2235 = vmatpush.bf16.msra.mxu0 %v2196
      %2236 = vmatmul.bf16.gmra.mxu0 %v2080
      %v2237 = vpop.f32.mrf.mxu0
      %v2238 = vadd.f32 %v2130, %v2237
      %v2239 = vpop.f32.mrf.mxu0
      %v2240 = vadd.f32 %v2130, %v2239
      %2241 = vmatmul.bf16.gmra.mxu0 %v2082
      %v2242 = vpop.f32.mrf.mxu0
      %v2243 = vadd.f32 %v2130, %v2242
      %v2244 = vpop.f32.mrf.mxu0
      %v2245 = vadd.f32 %v2130, %v2244
      %2246 = vmatmul.bf16.gmra.mxu0 %v2084
      %v2247 = vpop.f32.mrf.mxu0
      %v2248 = vadd.f32 %v2130, %v2247
      %v2249 = vpop.f32.mrf.mxu0
      %v2250 = vadd.f32 %v2130, %v2249
      %2251 = vmatmul.bf16.gmra.mxu0 %v2086
      %v2252 = vpop.f32.mrf.mxu0
      %v2253 = vadd.f32 %v2130, %v2252
      %v2254 = vpop.f32.mrf.mxu0
      %v2255 = vadd.f32 %v2130, %v2254
      %2256 = vmatmul.bf16.gmra.mxu0 %v2088
      %v2257 = vpop.f32.mrf.mxu0
      %v2258 = vadd.f32 %v2130, %v2257
      %v2259 = vpop.f32.mrf.mxu0
      %v2260 = vadd.f32 %v2130, %v2259
      %2261 = vmatmul.bf16.gmra.mxu0 %v2090
      %v2262 = vpop.f32.mrf.mxu0
      %v2263 = vadd.f32 %v2130, %v2262
      %v2264 = vpop.f32.mrf.mxu0
      %v2265 = vadd.f32 %v2130, %v2264
      %2266 = vmatmul.bf16.gmra.mxu0 %v2092
      %v2267 = vpop.f32.mrf.mxu0
      %v2268 = vadd.f32 %v2130, %v2267
      %v2269 = vpop.f32.mrf.mxu0
      %v2270 = vadd.f32 %v2130, %v2269
      %2271 = vmatmul.bf16.gmra.mxu0 %v2094
      %v2272 = vpop.f32.mrf.mxu0
      %v2273 = vadd.f32 %v2130, %v2272
      %v2274 = vpop.f32.mrf.mxu0
      %v2275 = vadd.f32 %v2130, %v2274
      %2276 = vdwg.mxu0
      %2277 = vmatpush.bf16.msra.mxu0 %v2211
      %2278 = vmatpush.bf16.msra.mxu0 %v2210
      %2279 = vmatpush.bf16.msra.mxu0 %v2209
      %2280 = vmatpush.bf16.msra.mxu0 %v2208
      %2281 = vmatpush.bf16.msra.mxu0 %v2207
      %2282 = vmatpush.bf16.msra.mxu0 %v2206
      %2283 = vmatpush.bf16.msra.mxu0 %v2205
      %2284 = vmatpush.bf16.msra.mxu0 %v2204
      %2285 = vmatmul.bf16.gmra.mxu0 %v2081
      %v2286 = vpop.f32.mrf.mxu0
      %v2287 = vadd.f32 %v2238, %v2286
      %v2288 = vpop.f32.mrf.mxu0
      %v2289 = vadd.f32 %v2240, %v2288
      %2290 = vmatmul.bf16.gmra.mxu0 %v2083
      %v2291 = vpop.f32.mrf.mxu0
      %v2292 = vadd.f32 %v2243, %v2291
      %v2293 = vpop.f32.mrf.mxu0
      %v2294 = vadd.f32 %v2245, %v2293
      %2295 = vmatmul.bf16.gmra.mxu0 %v2085
      %v2296 = vpop.f32.mrf.mxu0
      %v2297 = vadd.f32 %v2248, %v2296
      %v2298 = vpop.f32.mrf.mxu0
      %v2299 = vadd.f32 %v2250, %v2298
      %2300 = vmatmul.bf16.gmra.mxu0 %v2087
      %v2301 = vpop.f32.mrf.mxu0
      %v2302 = vadd.f32 %v2253, %v2301
      %v2303 = vpop.f32.mrf.mxu0
      %v2304 = vadd.f32 %v2255, %v2303
      %2305 = vmatmul.bf16.gmra.mxu0 %v2089
      %v2306 = vpop.f32.mrf.mxu0
      %v2307 = vadd.f32 %v2258, %v2306
      %v2308 = vpop.f32.mrf.mxu0
      %v2309 = vadd.f32 %v2260, %v2308
      %2310 = vmatmul.bf16.gmra.mxu0 %v2091
      %v2311 = vpop.f32.mrf.mxu0
      %v2312 = vadd.f32 %v2263, %v2311
      %v2313 = vpop.f32.mrf.mxu0
      %v2314 = vadd.f32 %v2265, %v2313
      %2315 = vmatmul.bf16.gmra.mxu0 %v2093
      %v2316 = vpop.f32.mrf.mxu0
      %v2317 = vadd.f32 %v2268, %v2316
      %v2318 = vpop.f32.mrf.mxu0
      %v2319 = vadd.f32 %v2270, %v2318
      %2320 = vmatmul.bf16.gmra.mxu0 %v2095
      %v2321 = vpop.f32.mrf.mxu0
      %v2322 = vadd.f32 %v2273, %v2321
      %v2323 = vpop.f32.mrf.mxu0
      %v2324 = vadd.f32 %v2275, %v2323
      %2325 = vdwg.mxu0
      %v2326 = vld [vmem:[%s366] sm:$0xff]
      %v2327 = vld [vmem:[%s366 + $0x8] sm:$0xff]
      %v2328 = vld [vmem:[%s366 + $0x10] sm:$0xff]
      %v2329 = vld [vmem:[%s366 + $0x18] sm:$0xff]
      %v2330 = vld [vmem:[%s366 + $0x20] sm:$0xff]
      %v2331 = vld [vmem:[%s366 + $0x28] sm:$0xff]
      %v2332 = vld [vmem:[%s366 + $0x30] sm:$0xff]
      %v2333 = vld [vmem:[%s366 + $0x38] sm:$0xff]
      %v2334 = vld [vmem:[%s366 + $0x40] sm:$0xff]
      %v2335 = vld [vmem:[%s366 + $0x48] sm:$0xff]
      %v2336 = vld [vmem:[%s366 + $0x50] sm:$0xff]
      %v2337 = vld [vmem:[%s366 + $0x58] sm:$0xff]
      %v2338 = vld [vmem:[%s366 + $0x60] sm:$0xff]
      %v2339 = vld [vmem:[%s366 + $0x68] sm:$0xff]
      %v2340 = vld [vmem:[%s366 + $0x70] sm:$0xff]
      %v2341 = vld [vmem:[%s366 + $0x78] sm:$0xff]
      %2343 = vset.pattern.permute.xlu0 0
      %2344 = vperm.xlu0 %2343, %v2326
      %v2345 = vpop.permute.xlu0 %2344
      %2348 = vset.pattern.permute.xlu0 0
      %2349 = vperm.xlu0 %2348, %v2327
      %v2350 = vpop.permute.xlu0 %2349
      %2353 = vset.pattern.permute.xlu0 0
      %2354 = vperm.xlu0 %2353, %v2328
      %v2355 = vpop.permute.xlu0 %2354
      %2358 = vset.pattern.permute.xlu0 0
      %2359 = vperm.xlu0 %2358, %v2329
      %v2360 = vpop.permute.xlu0 %2359
      %2363 = vset.pattern.permute.xlu0 0
      %2364 = vperm.xlu0 %2363, %v2330
      %v2365 = vpop.permute.xlu0 %2364
      %2368 = vset.pattern.permute.xlu0 0
      %2369 = vperm.xlu0 %2368, %v2331
      %v2370 = vpop.permute.xlu0 %2369
      %2373 = vset.pattern.permute.xlu0 0
      %2374 = vperm.xlu0 %2373, %v2332
      %v2375 = vpop.permute.xlu0 %2374
      %2378 = vset.pattern.permute.xlu0 0
      %2379 = vperm.xlu0 %2378, %v2333
      %v2380 = vpop.permute.xlu0 %2379
      %2383 = vset.pattern.permute.xlu0 0
      %2384 = vperm.xlu0 %2383, %v2334
      %v2385 = vpop.permute.xlu0 %2384
      %2388 = vset.pattern.permute.xlu0 0
      %2389 = vperm.xlu0 %2388, %v2335
      %v2390 = vpop.permute.xlu0 %2389
      %2393 = vset.pattern.permute.xlu0 0
      %2394 = vperm.xlu0 %2393, %v2336
      %v2395 = vpop.permute.xlu0 %2394
      %2398 = vset.pattern.permute.xlu0 0
      %2399 = vperm.xlu0 %2398, %v2337
      %v2400 = vpop.permute.xlu0 %2399
      %2403 = vset.pattern.permute.xlu0 0
      %2404 = vperm.xlu0 %2403, %v2338
      %v2405 = vpop.permute.xlu0 %2404
      %2408 = vset.pattern.permute.xlu0 0
      %2409 = vperm.xlu0 %2408, %v2339
      %v2410 = vpop.permute.xlu0 %2409
      %2413 = vset.pattern.permute.xlu0 0
      %2414 = vperm.xlu0 %2413, %v2340
      %v2415 = vpop.permute.xlu0 %2414
      %2418 = vset.pattern.permute.xlu0 0
      %2419 = vperm.xlu0 %2418, %v2341
      %v2420 = vpop.permute.xlu0 %2419
      %v2422 = vmul.f32 %v2287, %v2345
      %v2423 = vmul.f32 %v2289, %v2350
      %v2424 = vmul.f32 %v2292, %v2355
      %v2425 = vmul.f32 %v2294, %v2360
      %v2426 = vmul.f32 %v2297, %v2365
      %v2427 = vmul.f32 %v2299, %v2370
      %v2428 = vmul.f32 %v2302, %v2375
      %v2429 = vmul.f32 %v2304, %v2380
      %v2430 = vmul.f32 %v2307, %v2385
      %v2431 = vmul.f32 %v2309, %v2390
      %v2432 = vmul.f32 %v2312, %v2395
      %v2433 = vmul.f32 %v2314, %v2400
      %v2434 = vmul.f32 %v2317, %v2405
      %v2435 = vmul.f32 %v2319, %v2410
      %v2436 = vmul.f32 %v2322, %v2415
      %v2437 = vmul.f32 %v2324, %v2420
      %p2438 = scmp.eq.s32.totalorder %s24, 0
      // Predicated region
      $region53: #{liif_forward.1} parent=51 // pred_check
        %p2439 = pneg %p2438
      $region54: #{liif_forward.1} parent=51 // pred_check_branch
        %2441 = sbr.rel (%p2439) target = $region56
      $region55: #{liif_forward.1} parent=51 // pred_region
        %2442 = vst [vmem:[%s372] sm:$0xff] %v2422
        %2443 = vst [vmem:[%s372 + $0x8] sm:$0xff] %v2423
        %2444 = vst [vmem:[%s372 + $0x10] sm:$0xff] %v2424
        %2445 = vst [vmem:[%s372 + $0x18] sm:$0xff] %v2425
        %2446 = vst [vmem:[%s372 + $0x20] sm:$0xff] %v2426
        %2447 = vst [vmem:[%s372 + $0x28] sm:$0xff] %v2427
        %2448 = vst [vmem:[%s372 + $0x30] sm:$0xff] %v2428
        %2449 = vst [vmem:[%s372 + $0x38] sm:$0xff] %v2429
        %2450 = vst [vmem:[%s372 + $0x40] sm:$0xff] %v2430
        %2451 = vst [vmem:[%s372 + $0x48] sm:$0xff] %v2431
        %2452 = vst [vmem:[%s372 + $0x50] sm:$0xff] %v2432
        %2453 = vst [vmem:[%s372 + $0x58] sm:$0xff] %v2433
        %2454 = vst [vmem:[%s372 + $0x60] sm:$0xff] %v2434
        %2455 = vst [vmem:[%s372 + $0x68] sm:$0xff] %v2435
        %2456 = vst [vmem:[%s372 + $0x70] sm:$0xff] %v2436
        %2457 = vst [vmem:[%s372 + $0x78] sm:$0xff] %v2437
      $region56: #{liif_forward.1} parent=51 // pred_fallthru
        _
      %p2458 = scmp.gt.s32.totalorder %s24, 0
      // Predicated region
      $region57: #{liif_forward.1} parent=51 // pred_check
        %p2459 = pneg %p2458
      $region58: #{liif_forward.1} parent=51 // pred_check_branch
        %2461 = sbr.rel (%p2459) target = $region60
      $region59: #{liif_forward.1} parent=51 // pred_region
        %v2462 = vld [vmem:[%s372] sm:$0xff]
        %v2463 = vld [vmem:[%s372 + $0x8] sm:$0xff]
        %v2464 = vld [vmem:[%s372 + $0x10] sm:$0xff]
        %v2465 = vld [vmem:[%s372 + $0x18] sm:$0xff]
        %v2466 = vld [vmem:[%s372 + $0x20] sm:$0xff]
        %v2467 = vld [vmem:[%s372 + $0x28] sm:$0xff]
        %v2468 = vld [vmem:[%s372 + $0x30] sm:$0xff]
        %v2469 = vld [vmem:[%s372 + $0x38] sm:$0xff]
        %v2470 = vld [vmem:[%s372 + $0x40] sm:$0xff]
        %v2471 = vld [vmem:[%s372 + $0x48] sm:$0xff]
        %v2472 = vld [vmem:[%s372 + $0x50] sm:$0xff]
        %v2473 = vld [vmem:[%s372 + $0x58] sm:$0xff]
        %v2474 = vld [vmem:[%s372 + $0x60] sm:$0xff]
        %v2475 = vld [vmem:[%s372 + $0x68] sm:$0xff]
        %v2476 = vld [vmem:[%s372 + $0x70] sm:$0xff]
        %v2477 = vld [vmem:[%s372 + $0x78] sm:$0xff]
        %v2478 = vadd.f32 %v2462, %v2422
        %v2479 = vadd.f32 %v2463, %v2423
        %v2480 = vadd.f32 %v2464, %v2424
        %v2481 = vadd.f32 %v2465, %v2425
        %v2482 = vadd.f32 %v2466, %v2426
        %v2483 = vadd.f32 %v2467, %v2427
        %v2484 = vadd.f32 %v2468, %v2428
        %v2485 = vadd.f32 %v2469, %v2429
        %v2486 = vadd.f32 %v2470, %v2430
        %v2487 = vadd.f32 %v2471, %v2431
        %v2488 = vadd.f32 %v2472, %v2432
        %v2489 = vadd.f32 %v2473, %v2433
        %v2490 = vadd.f32 %v2474, %v2434
        %v2491 = vadd.f32 %v2475, %v2435
        %v2492 = vadd.f32 %v2476, %v2436
        %v2493 = vadd.f32 %v2477, %v2437
        %2494 = vst [vmem:[%s372] sm:$0xff] %v2478
        %2495 = vst [vmem:[%s372 + $0x8] sm:$0xff] %v2479
        %2496 = vst [vmem:[%s372 + $0x10] sm:$0xff] %v2480
        %2497 = vst [vmem:[%s372 + $0x18] sm:$0xff] %v2481
        %2498 = vst [vmem:[%s372 + $0x20] sm:$0xff] %v2482
        %2499 = vst [vmem:[%s372 + $0x28] sm:$0xff] %v2483
        %2500 = vst [vmem:[%s372 + $0x30] sm:$0xff] %v2484
        %2501 = vst [vmem:[%s372 + $0x38] sm:$0xff] %v2485
        %2502 = vst [vmem:[%s372 + $0x40] sm:$0xff] %v2486
        %2503 = vst [vmem:[%s372 + $0x48] sm:$0xff] %v2487
        %2504 = vst [vmem:[%s372 + $0x50] sm:$0xff] %v2488
        %2505 = vst [vmem:[%s372 + $0x58] sm:$0xff] %v2489
        %2506 = vst [vmem:[%s372 + $0x60] sm:$0xff] %v2490
        %2507 = vst [vmem:[%s372 + $0x68] sm:$0xff] %v2491
        %2508 = vst [vmem:[%s372 + $0x70] sm:$0xff] %v2492
        %2509 = vst [vmem:[%s372 + $0x78] sm:$0xff] %v2493
      $region60: #{liif_forward.1} parent=51 // pred_fallthru
        _
      %s2510 = smul.u32 16, %s23
      %p2511 = scmp.lt.s32.totalorder %s2510, 63
      %s2512 = scalar_select %p2511, %s2510, 63
      %s2513 = smul.addr %s2512, 8
      %s2514 = scalar_lea.vmem %s8, %s2513
      // Predicated region
      $region61: #{liif_forward.1} parent=51 // pred_check
        %p2515 = pneg %p231
      $region62: #{liif_forward.1} parent=51 // pred_check_branch
        %2517 = sbr.rel (%p2515) target = $region64
      $region63: #{liif_forward.1} parent=51 // pred_region
        %s2518 = smul.u32 16, %s23
      $region64: #{liif_forward.1} parent=51 // pred_fallthru
        _
    $region52: #{liif_forward.1} parent=5 // pred_fallthru
      _
    %p2519 = scmp.le.s32.totalorder 2, %s14
    // Predicated region
    $region65: #{liif_forward.1} parent=5 // pred_check
      %p2520 = pneg %p2519
    $region66: #{liif_forward.1} parent=5 // pred_check_branch
      %2522 = sbr.rel (%p2520) target = $region68
    $region67: #{liif_forward.1} parent=5 // pred_region
      %s2523 = ssub.s32 %s14, 2
      // Predicated region
      $region69: #{liif_forward.1} parent=67 // pred_check
        %p2524 = pneg %p237
      $region70: #{liif_forward.1} parent=67 // pred_check_branch
        %2526 = sbr.rel (%p2524) target = $region72
      $region71: #{liif_forward.1} parent=67 // pred_region
        %s2527 = smul.u32 16, %s25
        %p2528 = scmp.lt.s32.totalorder %s2527, 63
        %s2529 = scalar_select %p2528, %s2527, 63
        %s2530 = smul.addr %s2529, 8
        %s2531 = scalar_lea.vmem %s8, %s2530
      $region72: #{liif_forward.1} parent=67 // pred_fallthru
        _
    $region68: #{liif_forward.1} parent=5 // pred_fallthru
      _
  $region6: #{liif_forward.1} parent=0 // loop_footer
    %s18 = sadd.s32 1, %s14
  $region7: #{liif_forward.1} parent=0 // loop_footer_branch
    %13 = sbr.rel target = $region3
  $region8: #{liif_forward.1} parent=0 // loop_exit
    _

</llo_original>
